<compile_context>
chip_gen: v6e
topology: v6e:2x2x1
jax: 0.10.0
libtpu: 0.0.40
codegen_flags: <defaults>
</compile_context>

<pallas_src>
import functools

import jax
import jax.numpy as jnp
from jax import lax
from jax.experimental import pallas as pl
from jax.experimental.pallas import tpu as pltpu

# PixelCNN mask "B" taps of a 7x7 kernel: all rows above center, plus the
# center row up to and including the center column.  25 taps total.
MASK_B_TAPS = tuple((kh, kw) for kh in range(7) for kw in range(7)
                    if kh < 3 or (kh == 3 and kw <= 3))
T = len(MASK_B_TAPS)  # 25

# Matmul operand dtype.  jnp.bfloat16 is the right choice on v6e/v7x for
# large problems (f32 accumulate kept via preferred_element_type); float32
# here keeps the check against the f32 XLA reference tight.
MATMUL_DTYPE = jnp.float32


# ----------------------------- Pallas kernel --------------------------------

def _fused_residual_kernel(x_ref, w1_ref, w2s_ref, w3_ref, bias_ref,
                           masks_ref, o_ref, stacked_ref, *, H, W, NB):
    """One batch-slab per grid step, channel-major, lane-dense.

    x_ref     : (NB, C, H*W)        input images
    w1_ref    : (Cm, C)             1x1 conv (transposed)
    w2s_ref   : (Cm, KPAD)          mask-B 7x7 conv, taps stacked along K
    w3_ref    : (C, Cm)             1x1 conv (transposed)
    bias_ref  : (2*Cm + C, 1)       [b1 ; b2 ; b3] as column vectors
    masks_ref : (T, NB*H*W)         precomputed per-tap boundary masks
    o_ref     : (NB, C, H*W)
    stacked_ref: VMEM (KPAD, NB*H*W) scratch holding rolled+masked taps
    """
    HW = H * W
    L = NB * HW
    C = x_ref.shape[1]
    Cm = w1_ref.shape[0]
    kpad = stacked_ref.shape[0]

    xb = x_ref[...]                                   # (NB, C, HW) f32
    if NB == 1:
        x = xb[0]                                     # (C, HW)
    else:
        # In-VMEM relayout only (cheap vs HBM): images flattened onto lanes.
        x = jnp.transpose(xb, (1, 0, 2)).reshape(C, L)
    x_mm = x.astype(MATMUL_DTYPE)

    bias = bias_ref[...]                              # (2*Cm + C, 1) f32
    b1 = bias[:Cm]
    b2 = bias[Cm:2 * Cm]
    b3 = bias[2 * Cm:2 * Cm + C]

    # ---- Stage 1: 1x1 conv (C -> Cm) + ReLU --------------------------------
    h1 = jnp.dot(w1_ref[...], x_mm, preferred_element_type=jnp.float32)
    h1 = jnp.maximum(h1 + b1, 0.0)                    # (Cm, L) f32
    h1m = h1.astype(MATMUL_DTYPE)

    # ---- Stage 2: mask-B 7x7 conv (Cm -> Cm) as ONE stacked MXU dot --------
    # Each tap (dy, dx): lane-roll of the flattened spatial axis (XLU) so
    # lane (y, x) holds h1[y+dy, x+dx]; multiply by the host-precomputed
    # boundary mask (VPU); write into the K-stacked scratch.  Then a single
    # (Cm, KPAD) @ (KPAD, L) dot replaces 25 tiny dots + a VPU accumulation
    # chain.  Padding is implicit in the masks (no padded scratch, no seams
    # between flattened images, mask B enforced structurally).
    if kpad > T * Cm:                                 # zero the K padding rows
        stacked_ref[pl.ds(T * Cm, kpad - T * Cm), :] = jnp.zeros(
            (kpad - T * Cm, L), MATMUL_DTYPE)
    for t, (kh, kw) in enumerate(MASK_B_TAPS):
        dy, dx = kh - 3, kw - 3
        if dy == 0 and dx == 0:
            tap = h1m                                 # center tap: mask is all-ones
        else:
            shift = (-(dy * W + dx)) % L              # static, >= 0
            tap = pltpu.roll(h1m, shift=shift, axis=1)
            tap = tap * masks_ref[pl.ds(t, 1), :]     # zero out-of-image lanes
        stacked_ref[pl.ds(t * Cm, Cm), :] = tap
    h2 = jnp.dot(w2s_ref[...], stacked_ref[...],
                 preferred_element_type=jnp.float32)  # (Cm, L) f32
    h2 = jnp.maximum(h2 + b2, 0.0)
    h2m = h2.astype(MATMUL_DTYPE)

    # ---- Stage 3: 1x1 conv (Cm -> C) + bias + residual add -----------------
    out = jnp.dot(w3_ref[...], h2m, preferred_element_type=jnp.float32)
    res = out + b3 + x
    if NB == 1:
        o_ref[0] = res.astype(o_ref.dtype)
    else:
        o_ref[...] = jnp.transpose(res.reshape(C, NB, HW),
                                   (1, 0, 2)).astype(o_ref.dtype)


# ------------------------------- wrappers ------------------------------------

def _prepare_kernel_params(params):
    """Re-layout conv weights / biases for the fused channel-major kernel."""
    w1, b1, w2m, b2, w3, b3 = params
    C, Cm = w1.shape
    w1t = w1.T.astype(MATMUL_DTYPE)                              # (Cm, C)
    # Stack the 25 legal taps' (out, in) weights along K.  Taps outside mask
    # B are never referenced, so the mask is enforced structurally.
    w2s = jnp.concatenate([w2m[kh, kw].T for kh, kw in MASK_B_TAPS],
                          axis=1).astype(MATMUL_DTYPE)           # (Cm, T*Cm)
    kpad = ((T * Cm + 7) // 8) * 8                               # K multiple of 8
    if kpad > T * Cm:
        w2s = jnp.pad(w2s, ((0, 0), (0, kpad - T * Cm)))
    w3t = w3.T.astype(MATMUL_DTYPE)                              # (C, Cm)
    bias_all = jnp.concatenate(
        [b1.reshape(Cm), b2.reshape(Cm), b3.reshape(C)]
    ).reshape(-1, 1).astype(jnp.float32)                         # (2*Cm + C, 1)
    return w1t, w2s, w3t, bias_all, kpad


def _make_tap_masks(H, W, NB):
    """(T, NB*H*W) validity masks: 1 where tap (dy,dx) stays inside its image."""
    HW = H * W
    lane = jnp.arange(NB * HW)
    rem = lane % HW                       # per-image coordinates (no seam leak)
    yy = rem // W
    xx = rem % W
    rows = []
    for kh, kw in MASK_B_TAPS:
        dy, dx = kh - 3, kw - 3
        rows.append((yy + dy >= 0) & (yy + dy < H)
                    & (xx + dx >= 0) & (xx + dx < W))
    return jnp.stack(rows, axis=0).astype(MATMUL_DTYPE)


def residual_block_nchw(x, params):
    """x: (N, C, H, W) float32 -- same interface as the PyTorch module."""
    N, C, H, W = x.shape
    Cm = C // 2
    HW = H * W
    w1t, w2s, w3t, bias_all, kpad = _prepare_kernel_params(params)

    # Two parallel grid steps when the batch is even (keeps both v7x
    # TensorCores busy); each step flattens its NB images onto the lane axis
    # to amortise MXU weight loads and per-grid-step overhead.
    G = 2 if (N % 2 == 0 and N >= 2) else 1
    NB = N // G
    L = NB * HW
    masks = _make_tap_masks(H, W, NB)

    x_flat = x.reshape(N, C, HW)          # free, contiguous reshape

    kernel = functools.partial(_fused_residual_kernel, H=H, W=W, NB=NB)

    itemsize = jnp.dtype(MATMUL_DTYPE).itemsize
    flops = 2 * N * HW * (C * Cm + Cm * kpad + Cm * C) + 7 * N * HW * C
    bytes_accessed = (4 * 2 * N * C * HW                        # x in + out (f32)
                      + itemsize * (Cm * kpad + 2 * C * Cm + T * L)
                      + 4 * (2 * Cm + C))

    out = pl.pallas_call(
        kernel,
        out_shape=jax.ShapeDtypeStruct((N, C, HW), x.dtype),
        grid=(G,),
        in_specs=[
            pl.BlockSpec((NB, C, HW), lambda g: (g, 0, 0)),
            pl.BlockSpec((Cm, C), lambda g: (0, 0)),
            pl.BlockSpec((Cm, kpad), lambda g: (0, 0)),
            pl.BlockSpec((C, Cm), lambda g: (0, 0)),
            pl.BlockSpec((2 * Cm + C, 1), lambda g: (0, 0)),
            pl.BlockSpec((T, L), lambda g: (0, 0)),
        ],
        out_specs=pl.BlockSpec((NB, C, HW), lambda g: (g, 0, 0)),
        scratch_shapes=[pltpu.VMEM((kpad, L), MATMUL_DTYPE)],
        compiler_params=pltpu.CompilerParams(
            dimension_semantics=("parallel",)),
        cost_estimate=pl.CostEstimate(flops=flops, transcendentals=0,
                                      bytes_accessed=bytes_accessed),
    )(x_flat, w1t, w2s, w3t, bias_all, masks)
    return out.reshape(N, C, H, W)


# ----------------------- deterministic parameter init ------------------------

def init_params(key, n_channels):
    C = n_channels
    Cm = C // 2
    ks = jax.random.split(key, 6)
    w1 = jax.random.normal(ks[0], (C, Cm), jnp.float32) / jnp.sqrt(C)
    b1 = jax.random.normal(ks[1], (1, Cm), jnp.float32) * 0.05
    w2 = jax.random.normal(ks[2], (7, 7, Cm, Cm), jnp.float32) / jnp.sqrt(49.0 * Cm)
    # PixelCNN mask B (spatial): rows above center + center row up to center col.
    kh = jnp.arange(7)[:, None]
    kw = jnp.arange(7)[None, :]
    mask = ((kh < 3) | ((kh == 3) & (kw <= 3))).astype(jnp.float32)
    w2m = w2 * mask[:, :, None, None]
    b2 = jax.random.normal(ks[3], (1, Cm), jnp.float32) * 0.05
    w3 = jax.random.normal(ks[4], (Cm, C), jnp.float32) / jnp.sqrt(Cm)
    b3 = jax.random.normal(ks[5], (1, C), jnp.float32) * 0.05
    return (w1, b1, w2m, b2, w3, b3)


# ------------------------- pure-JAX reference (check) ------------------------

def ref_forward_nchw(x, params):
    w1, b1, w2m, b2, w3, b3 = params
    dn = ('NCHW', 'HWIO', 'NCHW')
    h1 = jax.nn.relu(
        lax.conv_general_dilated(x, w1.reshape(1, 1, *w1.shape), (1, 1),
                                 'VALID', dimension_numbers=dn)
        + b1.reshape(1, -1, 1, 1))
    h2 = jax.nn.relu(
        lax.conv_general_dilated(h1, w2m, (1, 1), [(3, 3), (3, 3)],
                                 dimension_numbers=dn)
        + b2.reshape(1, -1, 1, 1))
    out = (lax.conv_general_dilated(h2, w3.reshape(1, 1, *w3.shape), (1, 1),
                                    'VALID', dimension_numbers=dn)
           + b3.reshape(1, -1, 1, 1))
    return out + x


# ----------------------------------- main ------------------------------------

if __name__ == "__main__":
    key = jax.random.PRNGKey(0)
    k_x, k_p = jax.random.split(key)

    N, C, H, W = 2, 8, 16, 16          # n_channels = 8 (must be even)
    x_nchw = jax.random.normal(k_x, (N, C, H, W), jnp.float32)
    params = init_params(k_p, C)

    out = residual_block_nchw(x_nchw, params)
    out = jax.block_until_ready(out)

    # Correctness check against a pure-JAX reference of the masked-conv block.
    ref = ref_forward_nchw(x_nchw, params)
    assert out.shape == x_nchw.shape and out.dtype == x_nchw.dtype
    assert jnp.allclose(out, ref, atol=1e-4, rtol=1e-4)

    print("KERNEL_OK")
</pallas_src>

<mosaic_0001>
module attributes {stable_mosaic.version = 11 : i64} {
  func.func @_fused_residual_kernel(%arg0: i32, %arg1: memref<1x8x256xf32, #tpu.memory_space<vmem>>, %arg2: memref<4x8xf32, #tpu.memory_space<vmem>>, %arg3: memref<4x104xf32, #tpu.memory_space<vmem>>, %arg4: memref<8x4xf32, #tpu.memory_space<vmem>>, %arg5: memref<16x1xf32, #tpu.memory_space<vmem>>, %arg6: memref<25x256xf32, #tpu.memory_space<vmem>>, %arg7: memref<1x8x256xf32, #tpu.memory_space<vmem>>, %arg8: memref<104x256xf32, #tpu.memory_space<vmem>>) attributes {dimension_semantics = [#tpu.dimension_semantics<parallel>], iteration_bounds = array<i64: 2>, scalar_prefetch = 0 : i64, scratch_operands = 1 : i64, tpu.core_type = #tpu.core_type<tc>, window_params = [{transform_indices = @transform_0, window_bounds = array<i64: 1, 8, 256>}, {pipeline_mode = #tpu.pipeline_mode<synchronous>, transform_indices = @transform_1, window_bounds = array<i64: 4, 8>}, {pipeline_mode = #tpu.pipeline_mode<synchronous>, transform_indices = @transform_2, window_bounds = array<i64: 4, 104>}, {pipeline_mode = #tpu.pipeline_mode<synchronous>, transform_indices = @transform_3, window_bounds = array<i64: 8, 4>}, {pipeline_mode = #tpu.pipeline_mode<synchronous>, transform_indices = @transform_4, window_bounds = array<i64: 16, 1>}, {pipeline_mode = #tpu.pipeline_mode<synchronous>, transform_indices = @transform_5, window_bounds = array<i64: 25, 256>}, {transform_indices = @transform_6, window_bounds = array<i64: 1, 8, 256>}]} {
    %c0 = arith.constant 0 : index
    %c0_0 = arith.constant 0 : index
    %c0_1 = arith.constant 0 : index
    %0 = vector.load %arg1[%c0, %c0_0, %c0_1] : memref<1x8x256xf32, #tpu.memory_space<vmem>>, vector<1x8x256xf32>
    %1 = vector.shape_cast %0 : vector<1x8x256xf32> to vector<8x256xf32>
    %c0_2 = arith.constant 0 : index
    %c0_3 = arith.constant 0 : index
    %2 = vector.load %arg5[%c0_2, %c0_3] : memref<16x1xf32, #tpu.memory_space<vmem>>, vector<16x1xf32>
    %3 = vector.extract_strided_slice %2 {offsets = [0, 0], sizes = [4, 1], strides = [1, 1]} : vector<16x1xf32> to vector<4x1xf32>
    %4 = vector.extract_strided_slice %2 {offsets = [4, 0], sizes = [4, 1], strides = [1, 1]} : vector<16x1xf32> to vector<4x1xf32>
    %5 = vector.extract_strided_slice %2 {offsets = [8, 0], sizes = [8, 1], strides = [1, 1]} : vector<16x1xf32> to vector<8x1xf32>
    %c0_4 = arith.constant 0 : index
    %c0_5 = arith.constant 0 : index
    %6 = vector.load %arg2[%c0_4, %c0_5] : memref<4x8xf32, #tpu.memory_space<vmem>>, vector<4x8xf32>
    %cst = arith.constant dense<0.000000e+00> : vector<4x256xf32>
    %7 = tpu.matmul %6, %1, %cst {dimension_numbers = #tpu.dot_dimension_numbers<[1], [0], [0], [1], [0, 0, 1, 1], [], []>} : vector<4x8xf32>, vector<8x256xf32>, vector<4x256xf32> -> vector<4x256xf32>
    %8 = vector.broadcast %3 : vector<4x1xf32> to vector<4x256xf32>
    %9 = arith.addf %7, %8 : vector<4x256xf32>
    %cst_6 = arith.constant 0.000000e+00 : f32
    %10 = vector.broadcast %cst_6 : f32 to vector<4x256xf32>
    %11 = arith.maximumf %9, %10 : vector<4x256xf32>
    %cst_7 = arith.constant 0.000000e+00 : f32
    %12 = vector.broadcast %cst_7 : f32 to vector<4x256xf32>
    %c100 = arith.constant 100 : index
    %c0_8 = arith.constant 0 : index
    %13 = vector.load %arg8[%c100, %c0_8] : memref<104x256xf32, #tpu.memory_space<vmem>>, vector<4x256xf32>
    tpu.vector_store %arg8[%c100, %c0_8], %12 {strides = array<i32>} : memref<104x256xf32, #tpu.memory_space<vmem>>, vector<4x256xf32>,
    %c51_i32 = arith.constant 51 : i32
    %14 = tpu.dynamic_rotate %11 by %c51_i32 dim 1 : vector<4x256xf32>, i32 -> vector<4x256xf32>
    %c0_9 = arith.constant 0 : index
    %c0_10 = arith.constant 0 : index
    %15 = vector.load %arg6[%c0_9, %c0_10] : memref<25x256xf32, #tpu.memory_space<vmem>>, vector<1x256xf32>
    %16 = vector.broadcast %15 : vector<1x256xf32> to vector<4x256xf32>
    %17 = arith.mulf %14, %16 : vector<4x256xf32>
    %c0_11 = arith.constant 0 : index
    %c0_12 = arith.constant 0 : index
    %18 = vector.load %arg8[%c0_11, %c0_12] : memref<104x256xf32, #tpu.memory_space<vmem>>, vector<4x256xf32>
    tpu.vector_store %arg8[%c0_11, %c0_12], %17 {strides = array<i32>} : memref<104x256xf32, #tpu.memory_space<vmem>>, vector<4x256xf32>,
    %c50_i32 = arith.constant 50 : i32
    %19 = tpu.dynamic_rotate %11 by %c50_i32 dim 1 : vector<4x256xf32>, i32 -> vector<4x256xf32>
    %c1 = arith.constant 1 : index
    %c0_13 = arith.constant 0 : index
    %20 = vector.load %arg6[%c1, %c0_13] : memref<25x256xf32, #tpu.memory_space<vmem>>, vector<1x256xf32>
    %21 = vector.broadcast %20 : vector<1x256xf32> to vector<4x256xf32>
    %22 = arith.mulf %19, %21 : vector<4x256xf32>
    %c4 = arith.constant 4 : index
    %c0_14 = arith.constant 0 : index
    %23 = vector.load %arg8[%c4, %c0_14] : memref<104x256xf32, #tpu.memory_space<vmem>>, vector<4x256xf32>
    tpu.vector_store %arg8[%c4, %c0_14], %22 {strides = array<i32>} : memref<104x256xf32, #tpu.memory_space<vmem>>, vector<4x256xf32>,
    %c49_i32 = arith.constant 49 : i32
    %24 = tpu.dynamic_rotate %11 by %c49_i32 dim 1 : vector<4x256xf32>, i32 -> vector<4x256xf32>
    %c2 = arith.constant 2 : index
    %c0_15 = arith.constant 0 : index
    %25 = vector.load %arg6[%c2, %c0_15] : memref<25x256xf32, #tpu.memory_space<vmem>>, vector<1x256xf32>
    %26 = vector.broadcast %25 : vector<1x256xf32> to vector<4x256xf32>
    %27 = arith.mulf %24, %26 : vector<4x256xf32>
    %c8 = arith.constant 8 : index
    %c0_16 = arith.constant 0 : index
    %28 = vector.load %arg8[%c8, %c0_16] : memref<104x256xf32, #tpu.memory_space<vmem>>, vector<4x256xf32>
    tpu.vector_store %arg8[%c8, %c0_16], %27 {strides = array<i32>} : memref<104x256xf32, #tpu.memory_space<vmem>>, vector<4x256xf32>,
    %c48_i32 = arith.constant 48 : i32
    %29 = tpu.dynamic_rotate %11 by %c48_i32 dim 1 : vector<4x256xf32>, i32 -> vector<4x256xf32>
    %c3 = arith.constant 3 : index
    %c0_17 = arith.constant 0 : index
    %30 = vector.load %arg6[%c3, %c0_17] : memref<25x256xf32, #tpu.memory_space<vmem>>, vector<1x256xf32>
    %31 = vector.broadcast %30 : vector<1x256xf32> to vector<4x256xf32>
    %32 = arith.mulf %29, %31 : vector<4x256xf32>
    %c12 = arith.constant 12 : index
    %c0_18 = arith.constant 0 : index
    %33 = vector.load %arg8[%c12, %c0_18] : memref<104x256xf32, #tpu.memory_space<vmem>>, vector<4x256xf32>
    tpu.vector_store %arg8[%c12, %c0_18], %32 {strides = array<i32>} : memref<104x256xf32, #tpu.memory_space<vmem>>, vector<4x256xf32>,
    %c47_i32 = arith.constant 47 : i32
    %34 = tpu.dynamic_rotate %11 by %c47_i32 dim 1 : vector<4x256xf32>, i32 -> vector<4x256xf32>
    %c4_19 = arith.constant 4 : index
    %c0_20 = arith.constant 0 : index
    %35 = vector.load %arg6[%c4_19, %c0_20] : memref<25x256xf32, #tpu.memory_space<vmem>>, vector<1x256xf32>
    %36 = vector.broadcast %35 : vector<1x256xf32> to vector<4x256xf32>
    %37 = arith.mulf %34, %36 : vector<4x256xf32>
    %c16 = arith.constant 16 : index
    %c0_21 = arith.constant 0 : index
    %38 = vector.load %arg8[%c16, %c0_21] : memref<104x256xf32, #tpu.memory_space<vmem>>, vector<4x256xf32>
    tpu.vector_store %arg8[%c16, %c0_21], %37 {strides = array<i32>} : memref<104x256xf32, #tpu.memory_space<vmem>>, vector<4x256xf32>,
    %c46_i32 = arith.constant 46 : i32
    %39 = tpu.dynamic_rotate %11 by %c46_i32 dim 1 : vector<4x256xf32>, i32 -> vector<4x256xf32>
    %c5 = arith.constant 5 : index
    %c0_22 = arith.constant 0 : index
    %40 = vector.load %arg6[%c5, %c0_22] : memref<25x256xf32, #tpu.memory_space<vmem>>, vector<1x256xf32>
    %41 = vector.broadcast %40 : vector<1x256xf32> to vector<4x256xf32>
    %42 = arith.mulf %39, %41 : vector<4x256xf32>
    %c20 = arith.constant 20 : index
    %c0_23 = arith.constant 0 : index
    %43 = vector.load %arg8[%c20, %c0_23] : memref<104x256xf32, #tpu.memory_space<vmem>>, vector<4x256xf32>
    tpu.vector_store %arg8[%c20, %c0_23], %42 {strides = array<i32>} : memref<104x256xf32, #tpu.memory_space<vmem>>, vector<4x256xf32>,
    %c45_i32 = arith.constant 45 : i32
    %44 = tpu.dynamic_rotate %11 by %c45_i32 dim 1 : vector<4x256xf32>, i32 -> vector<4x256xf32>
    %c6 = arith.constant 6 : index
    %c0_24 = arith.constant 0 : index
    %45 = vector.load %arg6[%c6, %c0_24] : memref<25x256xf32, #tpu.memory_space<vmem>>, vector<1x256xf32>
    %46 = vector.broadcast %45 : vector<1x256xf32> to vector<4x256xf32>
    %47 = arith.mulf %44, %46 : vector<4x256xf32>
    %c24 = arith.constant 24 : index
    %c0_25 = arith.constant 0 : index
    %48 = vector.load %arg8[%c24, %c0_25] : memref<104x256xf32, #tpu.memory_space<vmem>>, vector<4x256xf32>
    tpu.vector_store %arg8[%c24, %c0_25], %47 {strides = array<i32>} : memref<104x256xf32, #tpu.memory_space<vmem>>, vector<4x256xf32>,
    %c35_i32 = arith.constant 35 : i32
    %49 = tpu.dynamic_rotate %11 by %c35_i32 dim 1 : vector<4x256xf32>, i32 -> vector<4x256xf32>
    %c7 = arith.constant 7 : index
    %c0_26 = arith.constant 0 : index
    %50 = vector.load %arg6[%c7, %c0_26] : memref<25x256xf32, #tpu.memory_space<vmem>>, vector<1x256xf32>
    %51 = vector.broadcast %50 : vector<1x256xf32> to vector<4x256xf32>
    %52 = arith.mulf %49, %51 : vector<4x256xf32>
    %c28 = arith.constant 28 : index
    %c0_27 = arith.constant 0 : index
    %53 = vector.load %arg8[%c28, %c0_27] : memref<104x256xf32, #tpu.memory_space<vmem>>, vector<4x256xf32>
    tpu.vector_store %arg8[%c28, %c0_27], %52 {strides = array<i32>} : memref<104x256xf32, #tpu.memory_space<vmem>>, vector<4x256xf32>,
    %c34_i32 = arith.constant 34 : i32
    %54 = tpu.dynamic_rotate %11 by %c34_i32 dim 1 : vector<4x256xf32>, i32 -> vector<4x256xf32>
    %c8_28 = arith.constant 8 : index
    %c0_29 = arith.constant 0 : index
    %55 = vector.load %arg6[%c8_28, %c0_29] : memref<25x256xf32, #tpu.memory_space<vmem>>, vector<1x256xf32>
    %56 = vector.broadcast %55 : vector<1x256xf32> to vector<4x256xf32>
    %57 = arith.mulf %54, %56 : vector<4x256xf32>
    %c32 = arith.constant 32 : index
    %c0_30 = arith.constant 0 : index
    %58 = vector.load %arg8[%c32, %c0_30] : memref<104x256xf32, #tpu.memory_space<vmem>>, vector<4x256xf32>
    tpu.vector_store %arg8[%c32, %c0_30], %57 {strides = array<i32>} : memref<104x256xf32, #tpu.memory_space<vmem>>, vector<4x256xf32>,
    %c33_i32 = arith.constant 33 : i32
    %59 = tpu.dynamic_rotate %11 by %c33_i32 dim 1 : vector<4x256xf32>, i32 -> vector<4x256xf32>
    %c9 = arith.constant 9 : index
    %c0_31 = arith.constant 0 : index
    %60 = vector.load %arg6[%c9, %c0_31] : memref<25x256xf32, #tpu.memory_space<vmem>>, vector<1x256xf32>
    %61 = vector.broadcast %60 : vector<1x256xf32> to vector<4x256xf32>
    %62 = arith.mulf %59, %61 : vector<4x256xf32>
    %c36 = arith.constant 36 : index
    %c0_32 = arith.constant 0 : index
    %63 = vector.load %arg8[%c36, %c0_32] : memref<104x256xf32, #tpu.memory_space<vmem>>, vector<4x256xf32>
    tpu.vector_store %arg8[%c36, %c0_32], %62 {strides = array<i32>} : memref<104x256xf32, #tpu.memory_space<vmem>>, vector<4x256xf32>,
    %c32_i32 = arith.constant 32 : i32
    %64 = tpu.dynamic_rotate %11 by %c32_i32 dim 1 : vector<4x256xf32>, i32 -> vector<4x256xf32>
    %c10 = arith.constant 10 : index
    %c0_33 = arith.constant 0 : index
    %65 = vector.load %arg6[%c10, %c0_33] : memref<25x256xf32, #tpu.memory_space<vmem>>, vector<1x256xf32>
    %66 = vector.broadcast %65 : vector<1x256xf32> to vector<4x256xf32>
    %67 = arith.mulf %64, %66 : vector<4x256xf32>
    %c40 = arith.constant 40 : index
    %c0_34 = arith.constant 0 : index
    %68 = vector.load %arg8[%c40, %c0_34] : memref<104x256xf32, #tpu.memory_space<vmem>>, vector<4x256xf32>
    tpu.vector_store %arg8[%c40, %c0_34], %67 {strides = array<i32>} : memref<104x256xf32, #tpu.memory_space<vmem>>, vector<4x256xf32>,
    %c31_i32 = arith.constant 31 : i32
    %69 = tpu.dynamic_rotate %11 by %c31_i32 dim 1 : vector<4x256xf32>, i32 -> vector<4x256xf32>
    %c11 = arith.constant 11 : index
    %c0_35 = arith.constant 0 : index
    %70 = vector.load %arg6[%c11, %c0_35] : memref<25x256xf32, #tpu.memory_space<vmem>>, vector<1x256xf32>
    %71 = vector.broadcast %70 : vector<1x256xf32> to vector<4x256xf32>
    %72 = arith.mulf %69, %71 : vector<4x256xf32>
    %c44 = arith.constant 44 : index
    %c0_36 = arith.constant 0 : index
    %73 = vector.load %arg8[%c44, %c0_36] : memref<104x256xf32, #tpu.memory_space<vmem>>, vector<4x256xf32>
    tpu.vector_store %arg8[%c44, %c0_36], %72 {strides = array<i32>} : memref<104x256xf32, #tpu.memory_space<vmem>>, vector<4x256xf32>,
    %c30_i32 = arith.constant 30 : i32
    %74 = tpu.dynamic_rotate %11 by %c30_i32 dim 1 : vector<4x256xf32>, i32 -> vector<4x256xf32>
    %c12_37 = arith.constant 12 : index
    %c0_38 = arith.constant 0 : index
    %75 = vector.load %arg6[%c12_37, %c0_38] : memref<25x256xf32, #tpu.memory_space<vmem>>, vector<1x256xf32>
    %76 = vector.broadcast %75 : vector<1x256xf32> to vector<4x256xf32>
    %77 = arith.mulf %74, %76 : vector<4x256xf32>
    %c48 = arith.constant 48 : index
    %c0_39 = arith.constant 0 : index
    %78 = vector.load %arg8[%c48, %c0_39] : memref<104x256xf32, #tpu.memory_space<vmem>>, vector<4x256xf32>
    tpu.vector_store %arg8[%c48, %c0_39], %77 {strides = array<i32>} : memref<104x256xf32, #tpu.memory_space<vmem>>, vector<4x256xf32>,
    %c29_i32 = arith.constant 29 : i32
    %79 = tpu.dynamic_rotate %11 by %c29_i32 dim 1 : vector<4x256xf32>, i32 -> vector<4x256xf32>
    %c13 = arith.constant 13 : index
    %c0_40 = arith.constant 0 : index
    %80 = vector.load %arg6[%c13, %c0_40] : memref<25x256xf32, #tpu.memory_space<vmem>>, vector<1x256xf32>
    %81 = vector.broadcast %80 : vector<1x256xf32> to vector<4x256xf32>
    %82 = arith.mulf %79, %81 : vector<4x256xf32>
    %c52 = arith.constant 52 : index
    %c0_41 = arith.constant 0 : index
    %83 = vector.load %arg8[%c52, %c0_41] : memref<104x256xf32, #tpu.memory_space<vmem>>, vector<4x256xf32>
    tpu.vector_store %arg8[%c52, %c0_41], %82 {strides = array<i32>} : memref<104x256xf32, #tpu.memory_space<vmem>>, vector<4x256xf32>,
    %c19_i32 = arith.constant 19 : i32
    %84 = tpu.dynamic_rotate %11 by %c19_i32 dim 1 : vector<4x256xf32>, i32 -> vector<4x256xf32>
    %c14 = arith.constant 14 : index
    %c0_42 = arith.constant 0 : index
    %85 = vector.load %arg6[%c14, %c0_42] : memref<25x256xf32, #tpu.memory_space<vmem>>, vector<1x256xf32>
    %86 = vector.broadcast %85 : vector<1x256xf32> to vector<4x256xf32>
    %87 = arith.mulf %84, %86 : vector<4x256xf32>
    %c56 = arith.constant 56 : index
    %c0_43 = arith.constant 0 : index
    %88 = vector.load %arg8[%c56, %c0_43] : memref<104x256xf32, #tpu.memory_space<vmem>>, vector<4x256xf32>
    tpu.vector_store %arg8[%c56, %c0_43], %87 {strides = array<i32>} : memref<104x256xf32, #tpu.memory_space<vmem>>, vector<4x256xf32>,
    %c18_i32 = arith.constant 18 : i32
    %89 = tpu.dynamic_rotate %11 by %c18_i32 dim 1 : vector<4x256xf32>, i32 -> vector<4x256xf32>
    %c15 = arith.constant 15 : index
    %c0_44 = arith.constant 0 : index
    %90 = vector.load %arg6[%c15, %c0_44] : memref<25x256xf32, #tpu.memory_space<vmem>>, vector<1x256xf32>
    %91 = vector.broadcast %90 : vector<1x256xf32> to vector<4x256xf32>
    %92 = arith.mulf %89, %91 : vector<4x256xf32>
    %c60 = arith.constant 60 : index
    %c0_45 = arith.constant 0 : index
    %93 = vector.load %arg8[%c60, %c0_45] : memref<104x256xf32, #tpu.memory_space<vmem>>, vector<4x256xf32>
    tpu.vector_store %arg8[%c60, %c0_45], %92 {strides = array<i32>} : memref<104x256xf32, #tpu.memory_space<vmem>>, vector<4x256xf32>,
    %c17_i32 = arith.constant 17 : i32
    %94 = tpu.dynamic_rotate %11 by %c17_i32 dim 1 : vector<4x256xf32>, i32 -> vector<4x256xf32>
    %c16_46 = arith.constant 16 : index
    %c0_47 = arith.constant 0 : index
    %95 = vector.load %arg6[%c16_46, %c0_47] : memref<25x256xf32, #tpu.memory_space<vmem>>, vector<1x256xf32>
    %96 = vector.broadcast %95 : vector<1x256xf32> to vector<4x256xf32>
    %97 = arith.mulf %94, %96 : vector<4x256xf32>
    %c64 = arith.constant 64 : index
    %c0_48 = arith.constant 0 : index
    %98 = vector.load %arg8[%c64, %c0_48] : memref<104x256xf32, #tpu.memory_space<vmem>>, vector<4x256xf32>
    tpu.vector_store %arg8[%c64, %c0_48], %97 {strides = array<i32>} : memref<104x256xf32, #tpu.memory_space<vmem>>, vector<4x256xf32>,
    %c16_i32 = arith.constant 16 : i32
    %99 = tpu.dynamic_rotate %11 by %c16_i32 dim 1 : vector<4x256xf32>, i32 -> vector<4x256xf32>
    %c17 = arith.constant 17 : index
    %c0_49 = arith.constant 0 : index
    %100 = vector.load %arg6[%c17, %c0_49] : memref<25x256xf32, #tpu.memory_space<vmem>>, vector<1x256xf32>
    %101 = vector.broadcast %100 : vector<1x256xf32> to vector<4x256xf32>
    %102 = arith.mulf %99, %101 : vector<4x256xf32>
    %c68 = arith.constant 68 : index
    %c0_50 = arith.constant 0 : index
    %103 = vector.load %arg8[%c68, %c0_50] : memref<104x256xf32, #tpu.memory_space<vmem>>, vector<4x256xf32>
    tpu.vector_store %arg8[%c68, %c0_50], %102 {strides = array<i32>} : memref<104x256xf32, #tpu.memory_space<vmem>>, vector<4x256xf32>,
    %c15_i32 = arith.constant 15 : i32
    %104 = tpu.dynamic_rotate %11 by %c15_i32 dim 1 : vector<4x256xf32>, i32 -> vector<4x256xf32>
    %c18 = arith.constant 18 : index
    %c0_51 = arith.constant 0 : index
    %105 = vector.load %arg6[%c18, %c0_51] : memref<25x256xf32, #tpu.memory_space<vmem>>, vector<1x256xf32>
    %106 = vector.broadcast %105 : vector<1x256xf32> to vector<4x256xf32>
    %107 = arith.mulf %104, %106 : vector<4x256xf32>
    %c72 = arith.constant 72 : index
    %c0_52 = arith.constant 0 : index
    %108 = vector.load %arg8[%c72, %c0_52] : memref<104x256xf32, #tpu.memory_space<vmem>>, vector<4x256xf32>
    tpu.vector_store %arg8[%c72, %c0_52], %107 {strides = array<i32>} : memref<104x256xf32, #tpu.memory_space<vmem>>, vector<4x256xf32>,
    %c14_i32 = arith.constant 14 : i32
    %109 = tpu.dynamic_rotate %11 by %c14_i32 dim 1 : vector<4x256xf32>, i32 -> vector<4x256xf32>
    %c19 = arith.constant 19 : index
    %c0_53 = arith.constant 0 : index
    %110 = vector.load %arg6[%c19, %c0_53] : memref<25x256xf32, #tpu.memory_space<vmem>>, vector<1x256xf32>
    %111 = vector.broadcast %110 : vector<1x256xf32> to vector<4x256xf32>
    %112 = arith.mulf %109, %111 : vector<4x256xf32>
    %c76 = arith.constant 76 : index
    %c0_54 = arith.constant 0 : index
    %113 = vector.load %arg8[%c76, %c0_54] : memref<104x256xf32, #tpu.memory_space<vmem>>, vector<4x256xf32>
    tpu.vector_store %arg8[%c76, %c0_54], %112 {strides = array<i32>} : memref<104x256xf32, #tpu.memory_space<vmem>>, vector<4x256xf32>,
    %c13_i32 = arith.constant 13 : i32
    %114 = tpu.dynamic_rotate %11 by %c13_i32 dim 1 : vector<4x256xf32>, i32 -> vector<4x256xf32>
    %c20_55 = arith.constant 20 : index
    %c0_56 = arith.constant 0 : index
    %115 = vector.load %arg6[%c20_55, %c0_56] : memref<25x256xf32, #tpu.memory_space<vmem>>, vector<1x256xf32>
    %116 = vector.broadcast %115 : vector<1x256xf32> to vector<4x256xf32>
    %117 = arith.mulf %114, %116 : vector<4x256xf32>
    %c80 = arith.constant 80 : index
    %c0_57 = arith.constant 0 : index
    %118 = vector.load %arg8[%c80, %c0_57] : memref<104x256xf32, #tpu.memory_space<vmem>>, vector<4x256xf32>
    tpu.vector_store %arg8[%c80, %c0_57], %117 {strides = array<i32>} : memref<104x256xf32, #tpu.memory_space<vmem>>, vector<4x256xf32>,
    %c3_i32 = arith.constant 3 : i32
    %119 = tpu.dynamic_rotate %11 by %c3_i32 dim 1 : vector<4x256xf32>, i32 -> vector<4x256xf32>
    %c21 = arith.constant 21 : index
    %c0_58 = arith.constant 0 : index
    %120 = vector.load %arg6[%c21, %c0_58] : memref<25x256xf32, #tpu.memory_space<vmem>>, vector<1x256xf32>
    %121 = vector.broadcast %120 : vector<1x256xf32> to vector<4x256xf32>
    %122 = arith.mulf %119, %121 : vector<4x256xf32>
    %c84 = arith.constant 84 : index
    %c0_59 = arith.constant 0 : index
    %123 = vector.load %arg8[%c84, %c0_59] : memref<104x256xf32, #tpu.memory_space<vmem>>, vector<4x256xf32>
    tpu.vector_store %arg8[%c84, %c0_59], %122 {strides = array<i32>} : memref<104x256xf32, #tpu.memory_space<vmem>>, vector<4x256xf32>,
    %c2_i32 = arith.constant 2 : i32
    %124 = tpu.dynamic_rotate %11 by %c2_i32 dim 1 : vector<4x256xf32>, i32 -> vector<4x256xf32>
    %c22 = arith.constant 22 : index
    %c0_60 = arith.constant 0 : index
    %125 = vector.load %arg6[%c22, %c0_60] : memref<25x256xf32, #tpu.memory_space<vmem>>, vector<1x256xf32>
    %126 = vector.broadcast %125 : vector<1x256xf32> to vector<4x256xf32>
    %127 = arith.mulf %124, %126 : vector<4x256xf32>
    %c88 = arith.constant 88 : index
    %c0_61 = arith.constant 0 : index
    %128 = vector.load %arg8[%c88, %c0_61] : memref<104x256xf32, #tpu.memory_space<vmem>>, vector<4x256xf32>
    tpu.vector_store %arg8[%c88, %c0_61], %127 {strides = array<i32>} : memref<104x256xf32, #tpu.memory_space<vmem>>, vector<4x256xf32>,
    %c1_i32 = arith.constant 1 : i32
    %129 = tpu.dynamic_rotate %11 by %c1_i32 dim 1 : vector<4x256xf32>, i32 -> vector<4x256xf32>
    %c23 = arith.constant 23 : index
    %c0_62 = arith.constant 0 : index
    %130 = vector.load %arg6[%c23, %c0_62] : memref<25x256xf32, #tpu.memory_space<vmem>>, vector<1x256xf32>
    %131 = vector.broadcast %130 : vector<1x256xf32> to vector<4x256xf32>
    %132 = arith.mulf %129, %131 : vector<4x256xf32>
    %c92 = arith.constant 92 : index
    %c0_63 = arith.constant 0 : index
    %133 = vector.load %arg8[%c92, %c0_63] : memref<104x256xf32, #tpu.memory_space<vmem>>, vector<4x256xf32>
    tpu.vector_store %arg8[%c92, %c0_63], %132 {strides = array<i32>} : memref<104x256xf32, #tpu.memory_space<vmem>>, vector<4x256xf32>,
    %c96 = arith.constant 96 : index
    %c0_64 = arith.constant 0 : index
    %134 = vector.load %arg8[%c96, %c0_64] : memref<104x256xf32, #tpu.memory_space<vmem>>, vector<4x256xf32>
    tpu.vector_store %arg8[%c96, %c0_64], %11 {strides = array<i32>} : memref<104x256xf32, #tpu.memory_space<vmem>>, vector<4x256xf32>,
    %c0_65 = arith.constant 0 : index
    %c0_66 = arith.constant 0 : index
    %135 = vector.load %arg3[%c0_65, %c0_66] : memref<4x104xf32, #tpu.memory_space<vmem>>, vector<4x104xf32>
    %c0_67 = arith.constant 0 : index
    %c0_68 = arith.constant 0 : index
    %136 = vector.load %arg8[%c0_67, %c0_68] : memref<104x256xf32, #tpu.memory_space<vmem>>, vector<104x256xf32>
    %cst_69 = arith.constant dense<0.000000e+00> : vector<4x256xf32>
    %137 = tpu.matmul %135, %136, %cst_69 {dimension_numbers = #tpu.dot_dimension_numbers<[1], [0], [0], [1], [0, 0, 1, 1], [], []>} : vector<4x104xf32>, vector<104x256xf32>, vector<4x256xf32> -> vector<4x256xf32>
    %138 = vector.broadcast %4 : vector<4x1xf32> to vector<4x256xf32>
    %139 = arith.addf %137, %138 : vector<4x256xf32>
    %cst_70 = arith.constant 0.000000e+00 : f32
    %140 = vector.broadcast %cst_70 : f32 to vector<4x256xf32>
    %141 = arith.maximumf %139, %140 : vector<4x256xf32>
    %c0_71 = arith.constant 0 : index
    %c0_72 = arith.constant 0 : index
    %142 = vector.load %arg4[%c0_71, %c0_72] : memref<8x4xf32, #tpu.memory_space<vmem>>, vector<8x4xf32>
    %cst_73 = arith.constant dense<0.000000e+00> : vector<8x256xf32>
    %143 = tpu.matmul %142, %141, %cst_73 {dimension_numbers = #tpu.dot_dimension_numbers<[1], [0], [0], [1], [0, 0, 1, 1], [], []>} : vector<8x4xf32>, vector<4x256xf32>, vector<8x256xf32> -> vector<8x256xf32>
    %144 = vector.broadcast %5 : vector<8x1xf32> to vector<8x256xf32>
    %145 = arith.addf %143, %144 : vector<8x256xf32>
    %146 = arith.addf %145, %1 : vector<8x256xf32>
    %c0_74 = arith.constant 0 : index
    %c0_75 = arith.constant 0 : index
    %c0_76 = arith.constant 0 : index
    %147 = vector.load %arg7[%c0_74, %c0_75, %c0_76] : memref<1x8x256xf32, #tpu.memory_space<vmem>>, vector<1x8x256xf32>
    %148 = vector.shape_cast %147 : vector<1x8x256xf32> to vector<8x256xf32>
    %149 = vector.shape_cast %146 : vector<8x256xf32> to vector<1x8x256xf32>
    tpu.vector_store %arg7[%c0_74, %c0_75, %c0_76], %149 {strides = array<i32>} : memref<1x8x256xf32, #tpu.memory_space<vmem>>, vector<1x8x256xf32>,
    return
  }
  func.func @transform_0(%arg0: i32) -> (i32, i32, i32) {
    %c0_i32 = arith.constant 0 : i32
    %c0_i32_0 = arith.constant 0 : i32
    %c0_i32_1 = arith.constant 0 : i32
    return %arg0, %c0_i32, %c0_i32_0 : i32, i32, i32
  }
  func.func @transform_1(%arg0: i32) -> (i32, i32) {
    %c0_i32 = arith.constant 0 : i32
    %c0_i32_0 = arith.constant 0 : i32
    %c0_i32_1 = arith.constant 0 : i32
    return %c0_i32, %c0_i32_0 : i32, i32
  }
  func.func @transform_2(%arg0: i32) -> (i32, i32) {
    %c0_i32 = arith.constant 0 : i32
    %c0_i32_0 = arith.constant 0 : i32
    %c0_i32_1 = arith.constant 0 : i32
    return %c0_i32, %c0_i32_0 : i32, i32
  }
  func.func @transform_3(%arg0: i32) -> (i32, i32) {
    %c0_i32 = arith.constant 0 : i32
    %c0_i32_0 = arith.constant 0 : i32
    %c0_i32_1 = arith.constant 0 : i32
    return %c0_i32, %c0_i32_0 : i32, i32
  }
  func.func @transform_4(%arg0: i32) -> (i32, i32) {
    %c0_i32 = arith.constant 0 : i32
    %c0_i32_0 = arith.constant 0 : i32
    %c0_i32_1 = arith.constant 0 : i32
    return %c0_i32, %c0_i32_0 : i32, i32
  }
  func.func @transform_5(%arg0: i32) -> (i32, i32) {
    %c0_i32 = arith.constant 0 : i32
    %c0_i32_0 = arith.constant 0 : i32
    %c0_i32_1 = arith.constant 0 : i32
    return %c0_i32, %c0_i32_0 : i32, i32
  }
  func.func @transform_6(%arg0: i32) -> (i32, i32, i32) {
    %c0_i32 = arith.constant 0 : i32
    %c0_i32_0 = arith.constant 0 : i32
    %c0_i32_1 = arith.constant 0 : i32
    return %arg0, %c0_i32, %c0_i32_0 : i32, i32, i32
  }
}

</mosaic_0001>

<llo_original>
// kernel: tpu_custom_call.1
$region0: #{tpu_custom_call.1}
  #allocation0 [shape = 'u32[]', space=smem, size = 0x4, offset = 0x4, fixed_abs, tag = 'smem constant byte address 0x4 - core index']
  #allocation1 [shape = 'u32[144,128]{1,0:T(1,128)}', space=vmem, size = 0x12000, scoped, tag = 'internal scratch']
  #allocation2 [shape = 'f32[104,256]{1,0:T(8,128)}', space=vmem, size = 0x1a000, scoped, tag = 'scratch operand']
  %s0 = inlined_call_operand.hbm [shape: f32[2,8,256], index: 0, kind: input, shape index: {}]
  %s1 = inlined_call_operand.vmem [shape: f32[4,8], index: 1, kind: input, shape index: {}]
  %s2 = inlined_call_operand.vmem [shape: f32[4,104], index: 2, kind: input, shape index: {}]
  %s3 = inlined_call_operand.vmem [shape: f32[8,4], index: 3, kind: input, shape index: {}]
  %s4 = inlined_call_operand.vmem [shape: f32[16,1], index: 4, kind: input, shape index: {}]
  %s5 = inlined_call_operand.hbm [shape: f32[25,256], index: 5, kind: input, shape index: {}]
  %s6 = inlined_call_operand.hbm [shape: f32[2,8,256], index: 6, kind: output, shape index: {}]
  %s7 = sld [smem:[#allocation0]]
  $region65: #{tpu_custom_call.1} parent=0
    _
  %s9 = ssub.s32 1, %s7
  %s10 = scalar_select 0, %s9, %s7
  $region1: #{tpu_custom_call.1} parent=0
    #allocation3 [shape = 'u8[16384]{0}', space=vmem, size = 0x4000, scoped, tag = 'input window, operand 0']
    #allocation4 [shape = 's32[2]{0}', space=sflag, size = 0x8, scoped, tag = 'scoped memory for tpu_custom_call.1']
    #allocation5 [shape = 's32[2]{0}', space=sflag, size = 0x8, scoped, tag = 'scoped memory for tpu_custom_call.1']
    #allocation6 [shape = 'u8[32768]{0}', space=vmem, size = 0x8000, scoped, tag = 'input window, operand 5, single buffered']
    #allocation7 [shape = 's32[1]{0}', space=sflag, size = 0x4, scoped, tag = 'scoped memory for tpu_custom_call.1']
    #allocation8 [shape = 'u8[16384]{0}', space=vmem, size = 0x4000, scoped, tag = 'output window, operand 0']
    %11 = vsyncpa [#allocation4], 0
    %s12 = scalar_lea.sflag [#allocation4], 1
    %13 = vsyncpa %s12, 0
    %14 = vsyncpa [#allocation7], 0
    %15 = vsyncpa [#allocation5], 0
    %s16 = scalar_lea.sflag [#allocation5], 1
    %17 = vsyncpa %s16, 0
    loop: start=0, step=1, limit=4
    $region2: #{tpu_custom_call.1} parent=1 // loop_pre_header
      _
    $region3: #{tpu_custom_call.1} parent=1 // loop_header
      %s19 = sphi 0, %s23
      %p20 = scmp.ge.s32.totalorder %s19, 4
      %s29 = sphi 0, %s31
      %s32 = sphi 0, %s29
      %s33 = sphi 0, %s32
      %s49 = sphi 0, %s33
      %s53 = sphi 0, %s53
      %s55 = sphi 0, %s53
      %s56 = sphi 0, %s55
      %s70 = sphi 0, %s56
      %s74 = sphi 0, %s74
      %s76 = sphi 0, %s74
      %s77 = sphi 0, %s76
      %s91 = sphi 0, %s77
      %s95 = sphi 0, %s95
      %s97 = sphi 0, %s95
      %s98 = sphi 0, %s97
      %s112 = sphi 0, %s98
      %s116 = sphi 0, %s116
      %s118 = sphi 0, %s116
      %s119 = sphi 0, %s118
      %s133 = sphi 0, %s119
      %s137 = sphi 0, %s137
      %s139 = sphi 0, %s137
      %s140 = sphi 0, %s139
      %s154 = sphi 0, %s140
      %s160 = sphi 0, %s162
      %s163 = sphi 0, %s160
      %s164 = sphi 0, %s163
      %s180 = sphi 0, %s164
    $region4: #{tpu_custom_call.1} parent=1 // loop_header_branch
      %22 = sbr.rel (%p20) target = $region8
    $region5: #{tpu_custom_call.1} parent=1 // loop_body
      %s24 = ssub.s32 %s19, 1
      %s25 = ssub.s32 %s19, 2
      %s26 = sadd.s32 %s19, 1
      %s27 = ssub.s32 %s19, %s26
      %p28 = scmp.eq.s32.totalorder %s27, 0
      %s30 = sadd.s32 %s29, 1
      %s31 = scalar_select %p28, %s29, %s30
      %p34 = pneg %p28
      %p35 = scmp.eq.s32.totalorder %s19, 1
      %p36 = por %p34, %p35
      %p37 = scmp.ne.s32.totalorder %s29, %s32
      %p38 = scmp.eq.s32.totalorder %s19, 0
      %p39 = por %p37, %p38
      %p40 = scmp.ne.s32.totalorder %s29, %s32
      %p41 = scmp.eq.s32.totalorder %s24, 1
      %p42 = por %p40, %p41
      %p43 = scmp.ne.s32.totalorder %s32, %s33
      %p44 = scmp.eq.s32.totalorder %s24, 0
      %p45 = por %p43, %p44
      %p46 = scmp.ne.s32.totalorder %s32, %s33
      %p47 = scmp.eq.s32.totalorder %s25, 1
      %p48 = por %p46, %p47
      %p50 = scmp.ne.s32.totalorder %s33, %s49
      %p51 = scmp.eq.s32.totalorder %s25, 0
      %p52 = por %p50, %p51
      %s54 = sadd.s32 %s53, 1
      %p57 = scmp.eq.s32.totalorder %s19, 1
      %p58 = scmp.ne.s32.totalorder %s53, %s55
      %p59 = scmp.eq.s32.totalorder %s19, 0
      %p60 = por %p58, %p59
      %p61 = scmp.ne.s32.totalorder %s53, %s55
      %p62 = scmp.eq.s32.totalorder %s24, 1
      %p63 = por %p61, %p62
      %p64 = scmp.ne.s32.totalorder %s55, %s56
      %p65 = scmp.eq.s32.totalorder %s24, 0
      %p66 = por %p64, %p65
      %p67 = scmp.ne.s32.totalorder %s55, %s56
      %p68 = scmp.eq.s32.totalorder %s25, 1
      %p69 = por %p67, %p68
      %p71 = scmp.ne.s32.totalorder %s56, %s70
      %p72 = scmp.eq.s32.totalorder %s25, 0
      %p73 = por %p71, %p72
      %s75 = sadd.s32 %s74, 1
      %p78 = scmp.eq.s32.totalorder %s19, 1
      %p79 = scmp.ne.s32.totalorder %s74, %s76
      %p80 = scmp.eq.s32.totalorder %s19, 0
      %p81 = por %p79, %p80
      %p82 = scmp.ne.s32.totalorder %s74, %s76
      %p83 = scmp.eq.s32.totalorder %s24, 1
      %p84 = por %p82, %p83
      %p85 = scmp.ne.s32.totalorder %s76, %s77
      %p86 = scmp.eq.s32.totalorder %s24, 0
      %p87 = por %p85, %p86
      %p88 = scmp.ne.s32.totalorder %s76, %s77
      %p89 = scmp.eq.s32.totalorder %s25, 1
      %p90 = por %p88, %p89
      %p92 = scmp.ne.s32.totalorder %s77, %s91
      %p93 = scmp.eq.s32.totalorder %s25, 0
      %p94 = por %p92, %p93
      %s96 = sadd.s32 %s95, 1
      %p99 = scmp.eq.s32.totalorder %s19, 1
      %p100 = scmp.ne.s32.totalorder %s95, %s97
      %p101 = scmp.eq.s32.totalorder %s19, 0
      %p102 = por %p100, %p101
      %p103 = scmp.ne.s32.totalorder %s95, %s97
      %p104 = scmp.eq.s32.totalorder %s24, 1
      %p105 = por %p103, %p104
      %p106 = scmp.ne.s32.totalorder %s97, %s98
      %p107 = scmp.eq.s32.totalorder %s24, 0
      %p108 = por %p106, %p107
      %p109 = scmp.ne.s32.totalorder %s97, %s98
      %p110 = scmp.eq.s32.totalorder %s25, 1
      %p111 = por %p109, %p110
      %p113 = scmp.ne.s32.totalorder %s98, %s112
      %p114 = scmp.eq.s32.totalorder %s25, 0
      %p115 = por %p113, %p114
      %s117 = sadd.s32 %s116, 1
      %p120 = scmp.eq.s32.totalorder %s19, 1
      %p121 = scmp.ne.s32.totalorder %s116, %s118
      %p122 = scmp.eq.s32.totalorder %s19, 0
      %p123 = por %p121, %p122
      %p124 = scmp.ne.s32.totalorder %s116, %s118
      %p125 = scmp.eq.s32.totalorder %s24, 1
      %p126 = por %p124, %p125
      %p127 = scmp.ne.s32.totalorder %s118, %s119
      %p128 = scmp.eq.s32.totalorder %s24, 0
      %p129 = por %p127, %p128
      %p130 = scmp.ne.s32.totalorder %s118, %s119
      %p131 = scmp.eq.s32.totalorder %s25, 1
      %p132 = por %p130, %p131
      %p134 = scmp.ne.s32.totalorder %s119, %s133
      %p135 = scmp.eq.s32.totalorder %s25, 0
      %p136 = por %p134, %p135
      %s138 = sadd.s32 %s137, 1
      %p141 = scmp.eq.s32.totalorder %s19, 1
      %p142 = scmp.ne.s32.totalorder %s137, %s139
      %p143 = scmp.eq.s32.totalorder %s19, 0
      %p144 = por %p142, %p143
      %p145 = scmp.ne.s32.totalorder %s137, %s139
      %p146 = scmp.eq.s32.totalorder %s24, 1
      %p147 = por %p145, %p146
      %p148 = scmp.ne.s32.totalorder %s139, %s140
      %p149 = scmp.eq.s32.totalorder %s24, 0
      %p150 = por %p148, %p149
      %p151 = scmp.ne.s32.totalorder %s139, %s140
      %p152 = scmp.eq.s32.totalorder %s25, 1
      %p153 = por %p151, %p152
      %p155 = scmp.ne.s32.totalorder %s140, %s154
      %p156 = scmp.eq.s32.totalorder %s25, 0
      %p157 = por %p155, %p156
      %s158 = ssub.s32 %s19, %s26
      %p159 = scmp.eq.s32.totalorder %s158, 0
      %s161 = sadd.s32 %s160, 1
      %s162 = scalar_select %p159, %s160, %s161
      %p165 = pneg %p159
      %p166 = scmp.eq.s32.totalorder %s19, 1
      %p167 = por %p165, %p166
      %p168 = scmp.ne.s32.totalorder %s160, %s163
      %p169 = scmp.eq.s32.totalorder %s19, 0
      %p170 = por %p168, %p169
      %p171 = scmp.ne.s32.totalorder %s160, %s163
      %p172 = scmp.eq.s32.totalorder %s24, 1
      %p173 = por %p171, %p172
      %p174 = scmp.ne.s32.totalorder %s163, %s164
      %p175 = scmp.eq.s32.totalorder %s24, 0
      %p176 = por %p174, %p175
      %p177 = scmp.ne.s32.totalorder %s163, %s164
      %p178 = scmp.eq.s32.totalorder %s25, 1
      %p179 = por %p177, %p178
      %p181 = scmp.ne.s32.totalorder %s164, %s180
      %p182 = scmp.eq.s32.totalorder %s25, 0
      %p183 = por %p181, %p182
      %p184 = scmp.le.s32.totalorder 1, %s19
      %p185 = scmp.lt.s32.totalorder %s19, 3
      %p186 = pnand %p184, %p185
      %p187 = pneg %p186
      // Predicated region
      $region9: #{tpu_custom_call.1} parent=5 // pred_check
        _
      $region10: #{tpu_custom_call.1} parent=5 // pred_check_branch
        %189 = sbr.rel (%p186) target = $region12
      $region11: #{tpu_custom_call.1} parent=5 // pred_region
        %s190 = ssub.s32 %s19, 1
        // Predicated region
        $region13: #{tpu_custom_call.1} parent=11 // pred_check
          %p191 = pneg %p66
        $region14: #{tpu_custom_call.1} parent=11 // pred_check_branch
          %193 = sbr.rel (%p191) target = $region16
        $region15: #{tpu_custom_call.1} parent=11 // pred_region
          _
        $region16: #{tpu_custom_call.1} parent=11 // pred_fallthru
          _
        // Predicated region
        $region17: #{tpu_custom_call.1} parent=11 // pred_check
          %p194 = pneg %p87
        $region18: #{tpu_custom_call.1} parent=11 // pred_check_branch
          %196 = sbr.rel (%p194) target = $region20
        $region19: #{tpu_custom_call.1} parent=11 // pred_region
          _
        $region20: #{tpu_custom_call.1} parent=11 // pred_fallthru
          _
        // Predicated region
        $region21: #{tpu_custom_call.1} parent=11 // pred_check
          %p197 = pneg %p108
        $region22: #{tpu_custom_call.1} parent=11 // pred_check_branch
          %199 = sbr.rel (%p197) target = $region24
        $region23: #{tpu_custom_call.1} parent=11 // pred_region
          _
        $region24: #{tpu_custom_call.1} parent=11 // pred_fallthru
          _
        // Predicated region
        $region25: #{tpu_custom_call.1} parent=11 // pred_check
          %p200 = pneg %p129
        $region26: #{tpu_custom_call.1} parent=11 // pred_check_branch
          %202 = sbr.rel (%p200) target = $region28
        $region27: #{tpu_custom_call.1} parent=11 // pred_region
          _
        $region28: #{tpu_custom_call.1} parent=11 // pred_fallthru
          _
        // Predicated region
        $region29: #{tpu_custom_call.1} parent=11 // pred_check
          %p203 = pneg %p150
        $region30: #{tpu_custom_call.1} parent=11 // pred_check_branch
          %205 = sbr.rel (%p203) target = $region32
        $region31: #{tpu_custom_call.1} parent=11 // pred_region
          %s207 = ssub.s32 1024, 1024
          %208 = vsyncadd [#allocation7], %s207
          %s209 = sshll.u32 [#allocation6], 4
          %s210 = int_to_ptr.vmem [resolvable:$true] %s209
          %215 = dma.hbm_to_vmem [thread:$0]  %s5, 1024, %s210, [#allocation7], 256, 256, 16
        $region32: #{tpu_custom_call.1} parent=11 // pred_fallthru
          _
      $region12: #{tpu_custom_call.1} parent=5 // pred_fallthru
        _
      %p216 = scmp.lt.s32.totalorder %s19, 2
      // Predicated region
      $region33: #{tpu_custom_call.1} parent=5 // pred_check
        %p217 = pneg %p216
      $region34: #{tpu_custom_call.1} parent=5 // pred_check_branch
        %219 = sbr.rel (%p217) target = $region36
      $region35: #{tpu_custom_call.1} parent=5 // pred_region
        // Predicated region
        $region37: #{tpu_custom_call.1} parent=35 // pred_check
          %p220 = pneg %p39
        $region38: #{tpu_custom_call.1} parent=35 // pred_check_branch
          %222 = sbr.rel (%p220) target = $region40
        $region39: #{tpu_custom_call.1} parent=35 // pred_region
          %s223 = sand.u32 %s29, 1
          %s224 = scalar_lea.sflag [#allocation4], %s223
          %s225 = sand.u32 %s29, 1
          %s226 = smul.addr %s225, 16
          %s227 = scalar_lea.vmem [#allocation3], %s226
          %s229 = ssub.s32 256, 256
          %230 = vsyncadd %s224, %s229
          %s231 = smul.addr %s19, 2
          %s232 = smul.addr %s231, 128
          %s233 = scalar_lea.hbm %s0, %s232
          %s235 = sshll.u32 %s227, 4
          %s236 = int_to_ptr.vmem [resolvable:$true] %s235
          %238 = dma.hbm_to_vmem [thread:$0]  %s233, 256, %s236, %s224
        $region40: #{tpu_custom_call.1} parent=35 // pred_fallthru
          _
      $region36: #{tpu_custom_call.1} parent=5 // pred_fallthru
        _
      %p239 = scmp.le.s32.totalorder 1, %s19
      %p240 = scmp.lt.s32.totalorder %s19, 3
      %p241 = pnand %p239, %p240
      %p242 = pneg %p241
      // Predicated region
      $region41: #{tpu_custom_call.1} parent=5 // pred_check
        _
      $region42: #{tpu_custom_call.1} parent=5 // pred_check_branch
        %244 = sbr.rel (%p241) target = $region44
      $region43: #{tpu_custom_call.1} parent=5 // pred_region
        %s245 = ssub.s32 %s19, 1
        %s246 = sand.u32 %s32, 1
        %s247 = scalar_lea.sflag [#allocation4], %s246
        %s248 = sand.u32 %s32, 1
        %s249 = smul.addr %s248, 16
        %s250 = scalar_lea.vmem [#allocation3], %s249
        // Predicated region
        $region45: #{tpu_custom_call.1} parent=43 // pred_check
          %p251 = pneg %p45
        $region46: #{tpu_custom_call.1} parent=43 // pred_check_branch
          %253 = sbr.rel (%p251) target = $region48
        $region47: #{tpu_custom_call.1} parent=43 // pred_region
          %254 = dma.done %s247, 256
        $region48: #{tpu_custom_call.1} parent=43 // pred_fallthru
          _
        // Predicated region
        $region49: #{tpu_custom_call.1} parent=43 // pred_check
          %p255 = pneg %p150
        $region50: #{tpu_custom_call.1} parent=43 // pred_check_branch
          %257 = sbr.rel (%p255) target = $region52
        $region51: #{tpu_custom_call.1} parent=43 // pred_region
          %258 = dma.done [#allocation7], 1024
        $region52: #{tpu_custom_call.1} parent=43 // pred_fallthru
          _
        %s259 = sand.u32 %s32, 1
        %s260 = scalar_lea.sflag [#allocation4], %s259
        %s261 = sand.u32 %s32, 1
        %s262 = smul.addr %s261, 16
        %s263 = scalar_lea.vmem [#allocation3], %s262
        %p264 = pneg %p45
        %p265 = pneg %p42
        %p266 = pneg %p66
        %p267 = pneg %p63
        %p268 = pneg %p87
        %p269 = pneg %p84
        %p270 = pneg %p108
        %p271 = pneg %p105
        %p272 = pneg %p129
        %p273 = pneg %p126
        %p274 = pneg %p150
        %p275 = pneg %p147
        %p276 = pneg %p176
        %p277 = pneg %p173
        %s278 = sand.u32 %s163, 1
        %s279 = scalar_lea.sflag [#allocation5], %s278
        %s280 = sand.u32 %s163, 1
        %s281 = smul.addr %s280, 16
        %s282 = scalar_lea.vmem [#allocation8], %s281
        %v283 = vld [vmem:[%s250] sm:$0xff]
        %v284 = vld [vmem:[%s250 + $0x8] sm:$0xff]
        %v285 = vld [vmem:[%s4] sm:$0xff]
        %v286 = vld [vmem:[%s4 + $0x8] sm:$0xff]
        %v287 = vld [vmem:[%s1] sm:$0xf]
        %289 = vset.pattern.permute.xlu0 0
        %290 = vperm.xlu0 %289, %v285
        %v291 = vpop.permute.xlu0 %290
        %vm293 = vcmask 64512
        %v295 = vsel %vm293, %v287, 0
        %297 = vmatprep.subr.mxu0 0.0
        %298 = vmatpush1.msra.mxu0 0.0
        %299 = vmatprep.subr.mxu0 0.0
        %300 = vmatpush1.msra.mxu0 0.0
        %301 = vmatprep.subr.mxu0 0.0
        %302 = vmatpush1.msra.mxu0 0.0
        %303 = vmatprep.subr.mxu0 0.0
        %304 = vmatpush1.msra.mxu0 0.0
        %305 = vmatprep.subr.mxu0 0.0
        %306 = vmatpush1.msra.mxu0 0.0
        %307 = vmatprep.subr.mxu0 0.0
        %308 = vmatpush1.msra.mxu0 0.0
        %309 = vmatprep.subr.mxu0 0.0
        %310 = vmatpush1.msra.mxu0 0.0
        %311 = vmatprep.subr.mxu0 0.0
        %312 = vmatpush1.msra.mxu0 0.0
        %313 = vmatprep.subr.mxu0 0.0
        %314 = vmatpush1.msra.mxu0 0.0
        %315 = vmatprep.subr.mxu0 0.0
        %316 = vmatpush1.msra.mxu0 0.0
        %317 = vmatprep.subr.mxu0 0.0
        %318 = vmatpush1.msra.mxu0 0.0
        %319 = vmatprep.subr.mxu0 0.0
        %320 = vmatpush1.msra.mxu0 0.0
        %321 = vmatprep.subr.mxu0 0.0
        %322 = vmatpush1.msra.mxu0 0.0
        %323 = vmatprep.subr.mxu0 0.0
        %324 = vmatpush1.msra.mxu0 0.0
        %325 = vmatprep.subr.mxu0 0.0
        %326 = vmatpush1.msra.mxu0 0.0
        %327 = vmatprep.subr.mxu0 %v284
        %328 = vmatpush1.msra.mxu0 %v283
        %329 = vmatprep.subr.mxu0 0.0
        %330 = vmatpush2.msra.mxu0 0.0
        %331 = vmatprep.subr.mxu0 0.0
        %332 = vmatpush2.msra.mxu0 0.0
        %333 = vmatprep.subr.mxu0 0.0
        %334 = vmatpush2.msra.mxu0 0.0
        %335 = vmatprep.subr.mxu0 0.0
        %336 = vmatpush2.msra.mxu0 0.0
        %337 = vmatprep.subr.mxu0 0.0
        %338 = vmatpush2.msra.mxu0 0.0
        %339 = vmatprep.subr.mxu0 0.0
        %340 = vmatpush2.msra.mxu0 0.0
        %341 = vmatprep.subr.mxu0 0.0
        %342 = vmatpush2.msra.mxu0 0.0
        %343 = vmatprep.subr.mxu0 0.0
        %344 = vmatpush2.msra.mxu0 0.0
        %345 = vmatprep.subr.mxu0 0.0
        %346 = vmatpush2.msra.mxu0 0.0
        %347 = vmatprep.subr.mxu0 0.0
        %348 = vmatpush2.msra.mxu0 0.0
        %349 = vmatprep.subr.mxu0 0.0
        %350 = vmatpush2.msra.mxu0 0.0
        %351 = vmatprep.subr.mxu0 0.0
        %352 = vmatpush2.msra.mxu0 0.0
        %353 = vmatprep.subr.mxu0 0.0
        %354 = vmatpush2.msra.mxu0 0.0
        %355 = vmatprep.subr.mxu0 0.0
        %356 = vmatpush2.msra.mxu0 0.0
        %357 = vmatprep.subr.mxu0 0.0
        %358 = vmatpush2.msra.mxu0 0.0
        %359 = vmatprep.subr.mxu0 0.0
        %360 = vmatpush2.msra.mxu0 0.0
        %361 = vmatprep.mubr.f32.mxu0 0.0
        %362 = vmatmul.mubr.f32.gmra.mxu0 %v295
        %v363 = vpop.f32.mrf.mxu0
        %v364 = vadd.f32 %v291, %v363
        %v365 = vpop.f32.mrf.mxu0
        %v366 = vadd.f32 %v291, %v365
        %367 = vdwg.mxu0
        %v368 = vmax.f32 %v364, 0.0
        %v369 = vmax.f32 %v366, 0.0
        %370 = vst [vmem:[#allocation2 + $0xc0] sm:$0xf0] 0.0
        %371 = vst [vmem:[#allocation2 + $0xc8] sm:$0xf0] 0.0
        %372 = vrot.lane.b32.xlu0 %v368, 51
        %v373 = vpop.permute.xlu0 %372
        %374 = vrot.lane.b32.xlu0 %v369, 51
        %v375 = vpop.permute.xlu0 %374
        %v376 = vlaneseq
        %v377 = vand.u32 %v376, 127
        %vm378 = vcmp.lt.s32.totalorder %v377, 51
        %v379 = vsel %vm378, %v373, %v375
        %v380 = vsel %vm378, %v375, %v373
        %v381 = vld [vmem:[#allocation6] ss:$8 sm:$0x3]
        %v383 = vlaneseq
        %v384 = vshrl.u32 %v383, 7
        %v385 = vsub.s32 0, %v384
        %v386 = vrot.slane %v381, %v385
        %v387 = vlaneseq
        %v388 = vshrl.u32 %v387, 7
        %v389 = vsub.s32 1, %v388
        %v390 = vrot.slane %v381, %v389
        %v393 = vmul.f32 %v380, %v386
        %v394 = vmul.f32 %v379, %v390
        %395 = vst [vmem:[#allocation2] sm:$0xf] %v393
        %396 = vst [vmem:[#allocation2 + $0x8] sm:$0xf] %v394
        %397 = vrot.lane.b32.xlu0 %v368, 50
        %v398 = vpop.permute.xlu0 %397
        %399 = vrot.lane.b32.xlu0 %v369, 50
        %v400 = vpop.permute.xlu0 %399
        %vm401 = vcmp.lt.s32.totalorder %v377, 50
        %v402 = vsel %vm401, %v398, %v400
        %v403 = vsel %vm401, %v400, %v398
        %s404 = scalar_lea.vmem [#allocation6], 1
        %v405 = vld [vmem:[%s404] ss:$8 sm:$0x3]
        %v407 = vlaneseq
        %v408 = vshrl.u32 %v407, 7
        %v409 = vsub.s32 0, %v408
        %v410 = vrot.slane %v405, %v409
        %v411 = vlaneseq
        %v412 = vshrl.u32 %v411, 7
        %v413 = vsub.s32 1, %v412
        %v414 = vrot.slane %v405, %v413
        %v417 = vmul.f32 %v403, %v410
        %v418 = vmul.f32 %v402, %v414
        %v421 = vrot.slane %v417, 4
        %v422 = vrot.slane %v418, 4
        %425 = vst [vmem:[#allocation2] sm:$0xf0] %v421
        %426 = vst [vmem:[#allocation2 + $0x8] sm:$0xf0] %v422
        %427 = vrot.lane.b32.xlu0 %v368, 49
        %v428 = vpop.permute.xlu0 %427
        %429 = vrot.lane.b32.xlu0 %v369, 49
        %v430 = vpop.permute.xlu0 %429
        %vm431 = vcmp.lt.s32.totalorder %v377, 49
        %v432 = vsel %vm431, %v428, %v430
        %v433 = vsel %vm431, %v430, %v428
        %s434 = scalar_lea.vmem [#allocation6], 2
        %v435 = vld [vmem:[%s434] ss:$8 sm:$0x3]
        %v437 = vlaneseq
        %v438 = vshrl.u32 %v437, 7
        %v439 = vsub.s32 0, %v438
        %v440 = vrot.slane %v435, %v439
        %v441 = vlaneseq
        %v442 = vshrl.u32 %v441, 7
        %v443 = vsub.s32 1, %v442
        %v444 = vrot.slane %v435, %v443
        %v447 = vmul.f32 %v433, %v440
        %v448 = vmul.f32 %v432, %v444
        %449 = vst [vmem:[#allocation2 + $0x10] sm:$0xf] %v447
        %450 = vst [vmem:[#allocation2 + $0x18] sm:$0xf] %v448
        %451 = vrot.lane.b32.xlu0 %v368, 48
        %v452 = vpop.permute.xlu0 %451
        %453 = vrot.lane.b32.xlu0 %v369, 48
        %v454 = vpop.permute.xlu0 %453
        %vm455 = vcmp.lt.s32.totalorder %v377, 48
        %v456 = vsel %vm455, %v452, %v454
        %v457 = vsel %vm455, %v454, %v452
        %s458 = scalar_lea.vmem [#allocation6], 3
        %v459 = vld [vmem:[%s458] ss:$8 sm:$0x3]
        %v461 = vlaneseq
        %v462 = vshrl.u32 %v461, 7
        %v463 = vsub.s32 0, %v462
        %v464 = vrot.slane %v459, %v463
        %v465 = vlaneseq
        %v466 = vshrl.u32 %v465, 7
        %v467 = vsub.s32 1, %v466
        %v468 = vrot.slane %v459, %v467
        %v471 = vmul.f32 %v457, %v464
        %v472 = vmul.f32 %v456, %v468
        %v475 = vrot.slane %v471, 4
        %v476 = vrot.slane %v472, 4
        %479 = vst [vmem:[#allocation2 + $0x10] sm:$0xf0] %v475
        %480 = vst [vmem:[#allocation2 + $0x18] sm:$0xf0] %v476
        %481 = vrot.lane.b32.xlu0 %v368, 47
        %v482 = vpop.permute.xlu0 %481
        %483 = vrot.lane.b32.xlu0 %v369, 47
        %v484 = vpop.permute.xlu0 %483
        %vm485 = vcmp.lt.s32.totalorder %v377, 47
        %v486 = vsel %vm485, %v482, %v484
        %v487 = vsel %vm485, %v484, %v482
        %s488 = scalar_lea.vmem [#allocation6], 4
        %v489 = vld [vmem:[%s488] ss:$8 sm:$0x3]
        %v491 = vlaneseq
        %v492 = vshrl.u32 %v491, 7
        %v493 = vsub.s32 0, %v492
        %v494 = vrot.slane %v489, %v493
        %v495 = vlaneseq
        %v496 = vshrl.u32 %v495, 7
        %v497 = vsub.s32 1, %v496
        %v498 = vrot.slane %v489, %v497
        %v501 = vmul.f32 %v487, %v494
        %v502 = vmul.f32 %v486, %v498
        %503 = vst [vmem:[#allocation2 + $0x20] sm:$0xf] %v501
        %504 = vst [vmem:[#allocation2 + $0x28] sm:$0xf] %v502
        %505 = vrot.lane.b32.xlu0 %v368, 46
        %v506 = vpop.permute.xlu0 %505
        %507 = vrot.lane.b32.xlu0 %v369, 46
        %v508 = vpop.permute.xlu0 %507
        %vm509 = vcmp.lt.s32.totalorder %v377, 46
        %v510 = vsel %vm509, %v506, %v508
        %v511 = vsel %vm509, %v508, %v506
        %s512 = scalar_lea.vmem [#allocation6], 5
        %v513 = vld [vmem:[%s512] ss:$8 sm:$0x3]
        %v515 = vlaneseq
        %v516 = vshrl.u32 %v515, 7
        %v517 = vsub.s32 0, %v516
        %v518 = vrot.slane %v513, %v517
        %v519 = vlaneseq
        %v520 = vshrl.u32 %v519, 7
        %v521 = vsub.s32 1, %v520
        %v522 = vrot.slane %v513, %v521
        %v525 = vmul.f32 %v511, %v518
        %v526 = vmul.f32 %v510, %v522
        %v529 = vrot.slane %v525, 4
        %v530 = vrot.slane %v526, 4
        %533 = vst [vmem:[#allocation2 + $0x20] sm:$0xf0] %v529
        %534 = vst [vmem:[#allocation2 + $0x28] sm:$0xf0] %v530
        %535 = vrot.lane.b32.xlu0 %v368, 45
        %v536 = vpop.permute.xlu0 %535
        %537 = vrot.lane.b32.xlu0 %v369, 45
        %v538 = vpop.permute.xlu0 %537
        %vm539 = vcmp.lt.s32.totalorder %v377, 45
        %v540 = vsel %vm539, %v536, %v538
        %v541 = vsel %vm539, %v538, %v536
        %s542 = scalar_lea.vmem [#allocation6], 6
        %v543 = vld [vmem:[%s542] ss:$8 sm:$0x3]
        %v545 = vlaneseq
        %v546 = vshrl.u32 %v545, 7
        %v547 = vsub.s32 0, %v546
        %v548 = vrot.slane %v543, %v547
        %v549 = vlaneseq
        %v550 = vshrl.u32 %v549, 7
        %v551 = vsub.s32 1, %v550
        %v552 = vrot.slane %v543, %v551
        %v555 = vmul.f32 %v541, %v548
        %v556 = vmul.f32 %v540, %v552
        %557 = vst [vmem:[#allocation2 + $0x30] sm:$0xf] %v555
        %558 = vst [vmem:[#allocation2 + $0x38] sm:$0xf] %v556
        %559 = vrot.lane.b32.xlu0 %v368, 35
        %v560 = vpop.permute.xlu0 %559
        %561 = vrot.lane.b32.xlu0 %v369, 35
        %v562 = vpop.permute.xlu0 %561
        %vm563 = vcmp.lt.s32.totalorder %v377, 35
        %v564 = vsel %vm563, %v560, %v562
        %v565 = vsel %vm563, %v562, %v560
        %s566 = scalar_lea.vmem [#allocation6], 7
        %v567 = vld [vmem:[%s566] ss:$8 sm:$0x3]
        %v569 = vlaneseq
        %v570 = vshrl.u32 %v569, 7
        %v571 = vsub.s32 0, %v570
        %v572 = vrot.slane %v567, %v571
        %v573 = vlaneseq
        %v574 = vshrl.u32 %v573, 7
        %v575 = vsub.s32 1, %v574
        %v576 = vrot.slane %v567, %v575
        %v579 = vmul.f32 %v565, %v572
        %v580 = vmul.f32 %v564, %v576
        %v583 = vrot.slane %v579, 4
        %v584 = vrot.slane %v580, 4
        %587 = vst [vmem:[#allocation2 + $0x30] sm:$0xf0] %v583
        %588 = vst [vmem:[#allocation2 + $0x38] sm:$0xf0] %v584
        %589 = vrot.lane.b32.xlu0 %v368, 34
        %v590 = vpop.permute.xlu0 %589
        %591 = vrot.lane.b32.xlu0 %v369, 34
        %v592 = vpop.permute.xlu0 %591
        %vm593 = vcmp.lt.s32.totalorder %v377, 34
        %v594 = vsel %vm593, %v590, %v592
        %v595 = vsel %vm593, %v592, %v590
        %s596 = scalar_lea.vmem [#allocation6], 16
        %v597 = vld [vmem:[%s596] ss:$8 sm:$0x3]
        %v599 = vlaneseq
        %v600 = vshrl.u32 %v599, 7
        %v601 = vsub.s32 0, %v600
        %v602 = vrot.slane %v597, %v601
        %v603 = vlaneseq
        %v604 = vshrl.u32 %v603, 7
        %v605 = vsub.s32 1, %v604
        %v606 = vrot.slane %v597, %v605
        %v609 = vmul.f32 %v595, %v602
        %v610 = vmul.f32 %v594, %v606
        %611 = vst [vmem:[#allocation2 + $0x40] sm:$0xf] %v609
        %612 = vst [vmem:[#allocation2 + $0x48] sm:$0xf] %v610
        %613 = vrot.lane.b32.xlu0 %v368, 33
        %v614 = vpop.permute.xlu0 %613
        %615 = vrot.lane.b32.xlu0 %v369, 33
        %v616 = vpop.permute.xlu0 %615
        %vm617 = vcmp.lt.s32.totalorder %v377, 33
        %v618 = vsel %vm617, %v614, %v616
        %v619 = vsel %vm617, %v616, %v614
        %s620 = scalar_lea.vmem [#allocation6], 17
        %v621 = vld [vmem:[%s620] ss:$8 sm:$0x3]
        %v623 = vlaneseq
        %v624 = vshrl.u32 %v623, 7
        %v625 = vsub.s32 0, %v624
        %v626 = vrot.slane %v621, %v625
        %v627 = vlaneseq
        %v628 = vshrl.u32 %v627, 7
        %v629 = vsub.s32 1, %v628
        %v630 = vrot.slane %v621, %v629
        %v633 = vmul.f32 %v619, %v626
        %v634 = vmul.f32 %v618, %v630
        %v637 = vrot.slane %v633, 4
        %v638 = vrot.slane %v634, 4
        %641 = vst [vmem:[#allocation2 + $0x40] sm:$0xf0] %v637
        %642 = vst [vmem:[#allocation2 + $0x48] sm:$0xf0] %v638
        %643 = vrot.lane.b32.xlu0 %v368, 32
        %v644 = vpop.permute.xlu0 %643
        %645 = vrot.lane.b32.xlu0 %v369, 32
        %v646 = vpop.permute.xlu0 %645
        %vm647 = vcmp.lt.s32.totalorder %v377, 32
        %v648 = vsel %vm647, %v644, %v646
        %v649 = vsel %vm647, %v646, %v644
        %s650 = scalar_lea.vmem [#allocation6], 18
        %v651 = vld [vmem:[%s650] ss:$8 sm:$0x3]
        %v653 = vlaneseq
        %v654 = vshrl.u32 %v653, 7
        %v655 = vsub.s32 0, %v654
        %v656 = vrot.slane %v651, %v655
        %v657 = vlaneseq
        %v658 = vshrl.u32 %v657, 7
        %v659 = vsub.s32 1, %v658
        %v660 = vrot.slane %v651, %v659
        %v663 = vmul.f32 %v649, %v656
        %v664 = vmul.f32 %v648, %v660
        %665 = vst [vmem:[#allocation2 + $0x50] sm:$0xf] %v663
        %666 = vst [vmem:[#allocation2 + $0x58] sm:$0xf] %v664
        %667 = vrot.lane.b32.xlu0 %v368, 31
        %v668 = vpop.permute.xlu0 %667
        %669 = vrot.lane.b32.xlu0 %v369, 31
        %v670 = vpop.permute.xlu0 %669
        %vm671 = vcmp.lt.s32.totalorder %v377, 31
        %v672 = vsel %vm671, %v668, %v670
        %v673 = vsel %vm671, %v670, %v668
        %s674 = scalar_lea.vmem [#allocation6], 19
        %v675 = vld [vmem:[%s674] ss:$8 sm:$0x3]
        %v677 = vlaneseq
        %v678 = vshrl.u32 %v677, 7
        %v679 = vsub.s32 0, %v678
        %v680 = vrot.slane %v675, %v679
        %v681 = vlaneseq
        %v682 = vshrl.u32 %v681, 7
        %v683 = vsub.s32 1, %v682
        %v684 = vrot.slane %v675, %v683
        %v687 = vmul.f32 %v673, %v680
        %v688 = vmul.f32 %v672, %v684
        %v691 = vrot.slane %v687, 4
        %v692 = vrot.slane %v688, 4
        %695 = vst [vmem:[#allocation2 + $0x50] sm:$0xf0] %v691
        %696 = vst [vmem:[#allocation2 + $0x58] sm:$0xf0] %v692
        %697 = vrot.lane.b32.xlu0 %v368, 30
        %v698 = vpop.permute.xlu0 %697
        %699 = vrot.lane.b32.xlu0 %v369, 30
        %v700 = vpop.permute.xlu0 %699
        %vm701 = vcmp.lt.s32.totalorder %v377, 30
        %v702 = vsel %vm701, %v698, %v700
        %v703 = vsel %vm701, %v700, %v698
        %s704 = scalar_lea.vmem [#allocation6], 20
        %v705 = vld [vmem:[%s704] ss:$8 sm:$0x3]
        %v707 = vlaneseq
        %v708 = vshrl.u32 %v707, 7
        %v709 = vsub.s32 0, %v708
        %v710 = vrot.slane %v705, %v709
        %v711 = vlaneseq
        %v712 = vshrl.u32 %v711, 7
        %v713 = vsub.s32 1, %v712
        %v714 = vrot.slane %v705, %v713
        %v717 = vmul.f32 %v703, %v710
        %v718 = vmul.f32 %v702, %v714
        %719 = vst [vmem:[#allocation2 + $0x60] sm:$0xf] %v717
        %720 = vst [vmem:[#allocation2 + $0x68] sm:$0xf] %v718
        %721 = vrot.lane.b32.xlu0 %v368, 29
        %v722 = vpop.permute.xlu0 %721
        %723 = vrot.lane.b32.xlu0 %v369, 29
        %v724 = vpop.permute.xlu0 %723
        %vm725 = vcmp.lt.s32.totalorder %v377, 29
        %v726 = vsel %vm725, %v722, %v724
        %v727 = vsel %vm725, %v724, %v722
        %s728 = scalar_lea.vmem [#allocation6], 21
        %v729 = vld [vmem:[%s728] ss:$8 sm:$0x3]
        %v731 = vlaneseq
        %v732 = vshrl.u32 %v731, 7
        %v733 = vsub.s32 0, %v732
        %v734 = vrot.slane %v729, %v733
        %v735 = vlaneseq
        %v736 = vshrl.u32 %v735, 7
        %v737 = vsub.s32 1, %v736
        %v738 = vrot.slane %v729, %v737
        %v741 = vmul.f32 %v727, %v734
        %v742 = vmul.f32 %v726, %v738
        %v745 = vrot.slane %v741, 4
        %v746 = vrot.slane %v742, 4
        %749 = vst [vmem:[#allocation2 + $0x60] sm:$0xf0] %v745
        %750 = vst [vmem:[#allocation2 + $0x68] sm:$0xf0] %v746
        %751 = vrot.lane.b32.xlu0 %v368, 19
        %v752 = vpop.permute.xlu0 %751
        %753 = vrot.lane.b32.xlu0 %v369, 19
        %v754 = vpop.permute.xlu0 %753
        %vm755 = vcmp.lt.s32.totalorder %v377, 19
        %v756 = vsel %vm755, %v752, %v754
        %v757 = vsel %vm755, %v754, %v752
        %s758 = scalar_lea.vmem [#allocation6], 22
        %v759 = vld [vmem:[%s758] ss:$8 sm:$0x3]
        %v761 = vlaneseq
        %v762 = vshrl.u32 %v761, 7
        %v763 = vsub.s32 0, %v762
        %v764 = vrot.slane %v759, %v763
        %v765 = vlaneseq
        %v766 = vshrl.u32 %v765, 7
        %v767 = vsub.s32 1, %v766
        %v768 = vrot.slane %v759, %v767
        %v771 = vmul.f32 %v757, %v764
        %v772 = vmul.f32 %v756, %v768
        %773 = vst [vmem:[#allocation2 + $0x70] sm:$0xf] %v771
        %774 = vst [vmem:[#allocation2 + $0x78] sm:$0xf] %v772
        %775 = vrot.lane.b32.xlu0 %v368, 18
        %v776 = vpop.permute.xlu0 %775
        %777 = vrot.lane.b32.xlu0 %v369, 18
        %v778 = vpop.permute.xlu0 %777
        %vm779 = vcmp.lt.s32.totalorder %v377, 18
        %v780 = vsel %vm779, %v776, %v778
        %v781 = vsel %vm779, %v778, %v776
        %s782 = scalar_lea.vmem [#allocation6], 23
        %v783 = vld [vmem:[%s782] ss:$8 sm:$0x3]
        %v785 = vlaneseq
        %v786 = vshrl.u32 %v785, 7
        %v787 = vsub.s32 0, %v786
        %v788 = vrot.slane %v783, %v787
        %v789 = vlaneseq
        %v790 = vshrl.u32 %v789, 7
        %v791 = vsub.s32 1, %v790
        %v792 = vrot.slane %v783, %v791
        %v795 = vmul.f32 %v781, %v788
        %v796 = vmul.f32 %v780, %v792
        %v799 = vrot.slane %v795, 4
        %v800 = vrot.slane %v796, 4
        %803 = vst [vmem:[#allocation2 + $0x70] sm:$0xf0] %v799
        %804 = vst [vmem:[#allocation2 + $0x78] sm:$0xf0] %v800
        %805 = vrot.lane.b32.xlu0 %v368, 17
        %v806 = vpop.permute.xlu0 %805
        %807 = vrot.lane.b32.xlu0 %v369, 17
        %v808 = vpop.permute.xlu0 %807
        %vm809 = vcmp.lt.s32.totalorder %v377, 17
        %v810 = vsel %vm809, %v806, %v808
        %v811 = vsel %vm809, %v808, %v806
        %s812 = scalar_lea.vmem [#allocation6], 32
        %v813 = vld [vmem:[%s812] ss:$8 sm:$0x3]
        %v815 = vlaneseq
        %v816 = vshrl.u32 %v815, 7
        %v817 = vsub.s32 0, %v816
        %v818 = vrot.slane %v813, %v817
        %v819 = vlaneseq
        %v820 = vshrl.u32 %v819, 7
        %v821 = vsub.s32 1, %v820
        %v822 = vrot.slane %v813, %v821
        %v825 = vmul.f32 %v811, %v818
        %v826 = vmul.f32 %v810, %v822
        %827 = vst [vmem:[#allocation2 + $0x80] sm:$0xf] %v825
        %828 = vst [vmem:[#allocation2 + $0x88] sm:$0xf] %v826
        %829 = vrot.lane.b32.xlu0 %v368, 16
        %v830 = vpop.permute.xlu0 %829
        %831 = vrot.lane.b32.xlu0 %v369, 16
        %v832 = vpop.permute.xlu0 %831
        %vm833 = vcmp.lt.s32.totalorder %v377, 16
        %v834 = vsel %vm833, %v830, %v832
        %v835 = vsel %vm833, %v832, %v830
        %s836 = scalar_lea.vmem [#allocation6], 33
        %v837 = vld [vmem:[%s836] ss:$8 sm:$0x3]
        %v839 = vlaneseq
        %v840 = vshrl.u32 %v839, 7
        %v841 = vsub.s32 0, %v840
        %v842 = vrot.slane %v837, %v841
        %v843 = vlaneseq
        %v844 = vshrl.u32 %v843, 7
        %v845 = vsub.s32 1, %v844
        %v846 = vrot.slane %v837, %v845
        %v849 = vmul.f32 %v835, %v842
        %v850 = vmul.f32 %v834, %v846
        %v853 = vrot.slane %v849, 4
        %v854 = vrot.slane %v850, 4
        %857 = vst [vmem:[#allocation2 + $0x80] sm:$0xf0] %v853
        %858 = vst [vmem:[#allocation2 + $0x88] sm:$0xf0] %v854
        %859 = vrot.lane.b32.xlu0 %v368, 15
        %v860 = vpop.permute.xlu0 %859
        %861 = vrot.lane.b32.xlu0 %v369, 15
        %v862 = vpop.permute.xlu0 %861
        %vm863 = vcmp.lt.s32.totalorder %v377, 15
        %v864 = vsel %vm863, %v860, %v862
        %v865 = vsel %vm863, %v862, %v860
        %s866 = scalar_lea.vmem [#allocation6], 34
        %v867 = vld [vmem:[%s866] ss:$8 sm:$0x3]
        %v869 = vlaneseq
        %v870 = vshrl.u32 %v869, 7
        %v871 = vsub.s32 0, %v870
        %v872 = vrot.slane %v867, %v871
        %v873 = vlaneseq
        %v874 = vshrl.u32 %v873, 7
        %v875 = vsub.s32 1, %v874
        %v876 = vrot.slane %v867, %v875
        %v879 = vmul.f32 %v865, %v872
        %v880 = vmul.f32 %v864, %v876
        %881 = vst [vmem:[#allocation2 + $0x90] sm:$0xf] %v879
        %882 = vst [vmem:[#allocation2 + $0x98] sm:$0xf] %v880
        %883 = vrot.lane.b32.xlu0 %v368, 14
        %v884 = vpop.permute.xlu0 %883
        %885 = vrot.lane.b32.xlu0 %v369, 14
        %v886 = vpop.permute.xlu0 %885
        %vm887 = vcmp.lt.s32.totalorder %v377, 14
        %v888 = vsel %vm887, %v884, %v886
        %v889 = vsel %vm887, %v886, %v884
        %s890 = scalar_lea.vmem [#allocation6], 35
        %v891 = vld [vmem:[%s890] ss:$8 sm:$0x3]
        %v893 = vlaneseq
        %v894 = vshrl.u32 %v893, 7
        %v895 = vsub.s32 0, %v894
        %v896 = vrot.slane %v891, %v895
        %v897 = vlaneseq
        %v898 = vshrl.u32 %v897, 7
        %v899 = vsub.s32 1, %v898
        %v900 = vrot.slane %v891, %v899
        %v903 = vmul.f32 %v889, %v896
        %v904 = vmul.f32 %v888, %v900
        %v907 = vrot.slane %v903, 4
        %v908 = vrot.slane %v904, 4
        %911 = vst [vmem:[#allocation2 + $0x90] sm:$0xf0] %v907
        %912 = vst [vmem:[#allocation2 + $0x98] sm:$0xf0] %v908
        %913 = vrot.lane.b32.xlu0 %v368, 13
        %v914 = vpop.permute.xlu0 %913
        %915 = vrot.lane.b32.xlu0 %v369, 13
        %v916 = vpop.permute.xlu0 %915
        %vm917 = vcmp.lt.s32.totalorder %v377, 13
        %v918 = vsel %vm917, %v914, %v916
        %v919 = vsel %vm917, %v916, %v914
        %s920 = scalar_lea.vmem [#allocation6], 36
        %v921 = vld [vmem:[%s920] ss:$8 sm:$0x3]
        %v923 = vlaneseq
        %v924 = vshrl.u32 %v923, 7
        %v925 = vsub.s32 0, %v924
        %v926 = vrot.slane %v921, %v925
        %v927 = vlaneseq
        %v928 = vshrl.u32 %v927, 7
        %v929 = vsub.s32 1, %v928
        %v930 = vrot.slane %v921, %v929
        %v933 = vmul.f32 %v919, %v926
        %v934 = vmul.f32 %v918, %v930
        %935 = vst [vmem:[#allocation2 + $0xa0] sm:$0xf] %v933
        %936 = vst [vmem:[#allocation2 + $0xa8] sm:$0xf] %v934
        %937 = vrot.lane.b32.xlu0 %v368, 3
        %v938 = vpop.permute.xlu0 %937
        %939 = vrot.lane.b32.xlu0 %v369, 3
        %v940 = vpop.permute.xlu0 %939
        %vm941 = vcmp.lt.s32.totalorder %v377, 3
        %v942 = vsel %vm941, %v938, %v940
        %v943 = vsel %vm941, %v940, %v938
        %s944 = scalar_lea.vmem [#allocation6], 37
        %v945 = vld [vmem:[%s944] ss:$8 sm:$0x3]
        %v947 = vlaneseq
        %v948 = vshrl.u32 %v947, 7
        %v949 = vsub.s32 0, %v948
        %v950 = vrot.slane %v945, %v949
        %v951 = vlaneseq
        %v952 = vshrl.u32 %v951, 7
        %v953 = vsub.s32 1, %v952
        %v954 = vrot.slane %v945, %v953
        %v957 = vmul.f32 %v943, %v950
        %v958 = vmul.f32 %v942, %v954
        %v961 = vrot.slane %v957, 4
        %v962 = vrot.slane %v958, 4
        %965 = vst [vmem:[#allocation2 + $0xa0] sm:$0xf0] %v961
        %966 = vst [vmem:[#allocation2 + $0xa8] sm:$0xf0] %v962
        %967 = vrot.lane.b32.xlu0 %v368, 2
        %v968 = vpop.permute.xlu0 %967
        %969 = vrot.lane.b32.xlu0 %v369, 2
        %v970 = vpop.permute.xlu0 %969
        %vm971 = vcmp.lt.s32.totalorder %v377, 2
        %v972 = vsel %vm971, %v968, %v970
        %v973 = vsel %vm971, %v970, %v968
        %s974 = scalar_lea.vmem [#allocation6], 38
        %v975 = vld [vmem:[%s974] ss:$8 sm:$0x3]
        %v977 = vlaneseq
        %v978 = vshrl.u32 %v977, 7
        %v979 = vsub.s32 0, %v978
        %v980 = vrot.slane %v975, %v979
        %v981 = vlaneseq
        %v982 = vshrl.u32 %v981, 7
        %v983 = vsub.s32 1, %v982
        %v984 = vrot.slane %v975, %v983
        %v987 = vmul.f32 %v973, %v980
        %v988 = vmul.f32 %v972, %v984
        %989 = vst [vmem:[#allocation2 + $0xb0] sm:$0xf] %v987
        %990 = vst [vmem:[#allocation2 + $0xb8] sm:$0xf] %v988
        %991 = vrot.lane.b32.xlu0 %v368, 1
        %v992 = vpop.permute.xlu0 %991
        %993 = vrot.lane.b32.xlu0 %v369, 1
        %v994 = vpop.permute.xlu0 %993
        %vm995 = vcmp.lt.s32.totalorder %v377, 1
        %v996 = vsel %vm995, %v992, %v994
        %v997 = vsel %vm995, %v994, %v992
        %s998 = scalar_lea.vmem [#allocation6], 39
        %v999 = vld [vmem:[%s998] ss:$8 sm:$0x3]
        %v1001 = vlaneseq
        %v1002 = vshrl.u32 %v1001, 7
        %v1003 = vsub.s32 0, %v1002
        %v1004 = vrot.slane %v999, %v1003
        %v1005 = vlaneseq
        %v1006 = vshrl.u32 %v1005, 7
        %v1007 = vsub.s32 1, %v1006
        %v1008 = vrot.slane %v999, %v1007
        %v1011 = vmul.f32 %v997, %v1004
        %v1012 = vmul.f32 %v996, %v1008
        %v1015 = vrot.slane %v1011, 4
        %v1016 = vrot.slane %v1012, 4
        %1019 = vst [vmem:[#allocation2 + $0xb0] sm:$0xf0] %v1015
        %1020 = vst [vmem:[#allocation2 + $0xb8] sm:$0xf0] %v1016
        %1021 = vst [vmem:[#allocation2 + $0xc0] sm:$0xf] %v368
        %1022 = vst [vmem:[#allocation2 + $0xc8] sm:$0xf] %v369
        %v1023 = vld [vmem:[%s2] sm:$0xf]
        %v1024 = vld [vmem:[#allocation2] sm:$0xff]
        %v1025 = vld [vmem:[#allocation2 + $0x8] sm:$0xff]
        %v1026 = vld [vmem:[#allocation2 + $0x10] sm:$0xff]
        %v1027 = vld [vmem:[#allocation2 + $0x18] sm:$0xff]
        %v1028 = vld [vmem:[#allocation2 + $0x20] sm:$0xff]
        %v1029 = vld [vmem:[#allocation2 + $0x28] sm:$0xff]
        %v1030 = vld [vmem:[#allocation2 + $0x30] sm:$0xff]
        %v1031 = vld [vmem:[#allocation2 + $0x38] sm:$0xff]
        %v1032 = vld [vmem:[#allocation2 + $0x40] sm:$0xff]
        %v1033 = vld [vmem:[#allocation2 + $0x48] sm:$0xff]
        %v1034 = vld [vmem:[#allocation2 + $0x50] sm:$0xff]
        %v1035 = vld [vmem:[#allocation2 + $0x58] sm:$0xff]
        %v1036 = vld [vmem:[#allocation2 + $0x60] sm:$0xff]
        %v1037 = vld [vmem:[#allocation2 + $0x68] sm:$0xff]
        %v1038 = vld [vmem:[#allocation2 + $0x70] sm:$0xff]
        %v1039 = vld [vmem:[#allocation2 + $0x78] sm:$0xff]
        %v1040 = vld [vmem:[#allocation2 + $0x80] sm:$0xff]
        %v1041 = vld [vmem:[#allocation2 + $0x88] sm:$0xff]
        %v1042 = vld [vmem:[#allocation2 + $0x90] sm:$0xff]
        %v1043 = vld [vmem:[#allocation2 + $0x98] sm:$0xff]
        %v1044 = vld [vmem:[#allocation2 + $0xa0] sm:$0xff]
        %v1045 = vld [vmem:[#allocation2 + $0xa8] sm:$0xff]
        %v1046 = vld [vmem:[#allocation2 + $0xb0] sm:$0xff]
        %v1047 = vld [vmem:[#allocation2 + $0xb8] sm:$0xff]
        %v1048 = vld [vmem:[#allocation2 + $0xc0] sm:$0xff]
        %v1049 = vld [vmem:[#allocation2 + $0xc8] sm:$0xff]
        %v1050 = vrot.slane %v291, 4
        %vm1052 = vcmask 850944
        %v1054 = vsel %vm1052, %v1023, 0
        %1056 = vmatprep.subr.mxu0 0.0
        %1057 = vmatpush1.msra.mxu0 0.0
        %1058 = vmatprep.subr.mxu0 0.0
        %1059 = vmatpush1.msra.mxu0 0.0
        %1060 = vmatprep.subr.mxu0 0.0
        %1061 = vmatpush1.msra.mxu0 0.0
        %1062 = vmatprep.subr.mxu0 %v1049
        %1063 = vmatpush1.msra.mxu0 %v1048
        %1064 = vmatprep.subr.mxu0 %v1047
        %1065 = vmatpush1.msra.mxu0 %v1046
        %1066 = vmatprep.subr.mxu0 %v1045
        %1067 = vmatpush1.msra.mxu0 %v1044
        %1068 = vmatprep.subr.mxu0 %v1043
        %1069 = vmatpush1.msra.mxu0 %v1042
        %1070 = vmatprep.subr.mxu0 %v1041
        %1071 = vmatpush1.msra.mxu0 %v1040
        %1072 = vmatprep.subr.mxu0 %v1039
        %1073 = vmatpush1.msra.mxu0 %v1038
        %1074 = vmatprep.subr.mxu0 %v1037
        %1075 = vmatpush1.msra.mxu0 %v1036
        %1076 = vmatprep.subr.mxu0 %v1035
        %1077 = vmatpush1.msra.mxu0 %v1034
        %1078 = vmatprep.subr.mxu0 %v1033
        %1079 = vmatpush1.msra.mxu0 %v1032
        %1080 = vmatprep.subr.mxu0 %v1031
        %1081 = vmatpush1.msra.mxu0 %v1030
        %1082 = vmatprep.subr.mxu0 %v1029
        %1083 = vmatpush1.msra.mxu0 %v1028
        %1084 = vmatprep.subr.mxu0 %v1027
        %1085 = vmatpush1.msra.mxu0 %v1026
        %1086 = vmatprep.subr.mxu0 %v1025
        %1087 = vmatpush1.msra.mxu0 %v1024
        %1088 = vmatprep.subr.mxu0 0.0
        %1089 = vmatpush2.msra.mxu0 0.0
        %1090 = vmatprep.subr.mxu0 0.0
        %1091 = vmatpush2.msra.mxu0 0.0
        %1092 = vmatprep.subr.mxu0 0.0
        %1093 = vmatpush2.msra.mxu0 0.0
        %1094 = vmatprep.subr.mxu0 0.0
        %1095 = vmatpush2.msra.mxu0 0.0
        %1096 = vmatprep.subr.mxu0 0.0
        %1097 = vmatpush2.msra.mxu0 0.0
        %1098 = vmatprep.subr.mxu0 0.0
        %1099 = vmatpush2.msra.mxu0 0.0
        %1100 = vmatprep.subr.mxu0 0.0
        %1101 = vmatpush2.msra.mxu0 0.0
        %1102 = vmatprep.subr.mxu0 0.0
        %1103 = vmatpush2.msra.mxu0 0.0
        %1104 = vmatprep.subr.mxu0 0.0
        %1105 = vmatpush2.msra.mxu0 0.0
        %1106 = vmatprep.subr.mxu0 0.0
        %1107 = vmatpush2.msra.mxu0 0.0
        %1108 = vmatprep.subr.mxu0 0.0
        %1109 = vmatpush2.msra.mxu0 0.0
        %1110 = vmatprep.subr.mxu0 0.0
        %1111 = vmatpush2.msra.mxu0 0.0
        %1112 = vmatprep.subr.mxu0 0.0
        %1113 = vmatpush2.msra.mxu0 0.0
        %1114 = vmatprep.subr.mxu0 0.0
        %1115 = vmatpush2.msra.mxu0 0.0
        %1116 = vmatprep.subr.mxu0 0.0
        %1117 = vmatpush2.msra.mxu0 0.0
        %1118 = vmatprep.subr.mxu0 0.0
        %1119 = vmatpush2.msra.mxu0 0.0
        %1120 = vmatprep.mubr.f32.mxu0 0.0
        %1121 = vmatmul.mubr.f32.gmra.mxu0 %v1054
        %v1122 = vpop.f32.mrf.mxu0
        %v1123 = vadd.f32 %v1050, %v1122
        %v1124 = vpop.f32.mrf.mxu0
        %v1125 = vadd.f32 %v1050, %v1124
        %1126 = vdwg.mxu0
        %v1127 = vmax.f32 %v1123, 0.0
        %v1128 = vmax.f32 %v1125, 0.0
        %v1129 = vld [vmem:[%s3] sm:$0xff]
        %1131 = vset.pattern.permute.xlu0 0
        %1132 = vperm.xlu0 %1131, %v286
        %v1133 = vpop.permute.xlu0 %1132
        %vm1135 = vcmask 31744
        %v1137 = vsel %vm1135, %v1129, 0
        %vm1139 = vcmask 1043456
        %v1141 = vsel %vm1139, %v1127, 0
        %v1144 = vsel %vm1139, %v1128, 0
        %1146 = vmatprep.subr.mxu0 0.0
        %1147 = vmatpush1.msra.mxu0 0.0
        %1148 = vmatprep.subr.mxu0 0.0
        %1149 = vmatpush1.msra.mxu0 0.0
        %1150 = vmatprep.subr.mxu0 0.0
        %1151 = vmatpush1.msra.mxu0 0.0
        %1152 = vmatprep.subr.mxu0 0.0
        %1153 = vmatpush1.msra.mxu0 0.0
        %1154 = vmatprep.subr.mxu0 0.0
        %1155 = vmatpush1.msra.mxu0 0.0
        %1156 = vmatprep.subr.mxu0 0.0
        %1157 = vmatpush1.msra.mxu0 0.0
        %1158 = vmatprep.subr.mxu0 0.0
        %1159 = vmatpush1.msra.mxu0 0.0
        %1160 = vmatprep.subr.mxu0 0.0
        %1161 = vmatpush1.msra.mxu0 0.0
        %1162 = vmatprep.subr.mxu0 0.0
        %1163 = vmatpush1.msra.mxu0 0.0
        %1164 = vmatprep.subr.mxu0 0.0
        %1165 = vmatpush1.msra.mxu0 0.0
        %1166 = vmatprep.subr.mxu0 0.0
        %1167 = vmatpush1.msra.mxu0 0.0
        %1168 = vmatprep.subr.mxu0 0.0
        %1169 = vmatpush1.msra.mxu0 0.0
        %1170 = vmatprep.subr.mxu0 0.0
        %1171 = vmatpush1.msra.mxu0 0.0
        %1172 = vmatprep.subr.mxu0 0.0
        %1173 = vmatpush1.msra.mxu0 0.0
        %1174 = vmatprep.subr.mxu0 0.0
        %1175 = vmatpush1.msra.mxu0 0.0
        %1176 = vmatprep.subr.mxu0 %v1144
        %1177 = vmatpush1.msra.mxu0 %v1141
        %1178 = vmatprep.subr.mxu0 0.0
        %1179 = vmatpush2.msra.mxu0 0.0
        %1180 = vmatprep.subr.mxu0 0.0
        %1181 = vmatpush2.msra.mxu0 0.0
        %1182 = vmatprep.subr.mxu0 0.0
        %1183 = vmatpush2.msra.mxu0 0.0
        %1184 = vmatprep.subr.mxu0 0.0
        %1185 = vmatpush2.msra.mxu0 0.0
        %1186 = vmatprep.subr.mxu0 0.0
        %1187 = vmatpush2.msra.mxu0 0.0
        %1188 = vmatprep.subr.mxu0 0.0
        %1189 = vmatpush2.msra.mxu0 0.0
        %1190 = vmatprep.subr.mxu0 0.0
        %1191 = vmatpush2.msra.mxu0 0.0
        %1192 = vmatprep.subr.mxu0 0.0
        %1193 = vmatpush2.msra.mxu0 0.0
        %1194 = vmatprep.subr.mxu0 0.0
        %1195 = vmatpush2.msra.mxu0 0.0
        %1196 = vmatprep.subr.mxu0 0.0
        %1197 = vmatpush2.msra.mxu0 0.0
        %1198 = vmatprep.subr.mxu0 0.0
        %1199 = vmatpush2.msra.mxu0 0.0
        %1200 = vmatprep.subr.mxu0 0.0
        %1201 = vmatpush2.msra.mxu0 0.0
        %1202 = vmatprep.subr.mxu0 0.0
        %1203 = vmatpush2.msra.mxu0 0.0
        %1204 = vmatprep.subr.mxu0 0.0
        %1205 = vmatpush2.msra.mxu0 0.0
        %1206 = vmatprep.subr.mxu0 0.0
        %1207 = vmatpush2.msra.mxu0 0.0
        %1208 = vmatprep.subr.mxu0 0.0
        %1209 = vmatpush2.msra.mxu0 0.0
        %1210 = vmatprep.mubr.f32.mxu0 0.0
        %1211 = vmatmul.mubr.f32.gmra.mxu0 %v1137
        %v1212 = vpop.f32.mrf.mxu0
        %v1213 = vadd.f32 %v1133, %v1212
        %v1214 = vpop.f32.mrf.mxu0
        %v1215 = vadd.f32 %v1133, %v1214
        %1216 = vdwg.mxu0
        %v1217 = vadd.f32 %v1213, %v283
        %v1218 = vadd.f32 %v1215, %v284
        %1219 = vst [vmem:[%s282] sm:$0xff] %v1217
        %1220 = vst [vmem:[%s282 + $0x8] sm:$0xff] %v1218
        %s1221 = sand.u32 %s163, 1
        %s1222 = scalar_lea.sflag [#allocation5], %s1221
        %s1223 = sand.u32 %s163, 1
        %s1224 = smul.addr %s1223, 16
        %s1225 = scalar_lea.vmem [#allocation8], %s1224
        // Predicated region
        $region53: #{tpu_custom_call.1} parent=43 // pred_check
          %p1226 = pneg %p173
        $region54: #{tpu_custom_call.1} parent=43 // pred_check_branch
          %1228 = sbr.rel (%p1226) target = $region56
        $region55: #{tpu_custom_call.1} parent=43 // pred_region
          %s1230 = ssub.s32 256, 256
          %1231 = vsyncadd %s1222, %s1230
          %s1232 = smul.addr %s24, 2
          %s1233 = smul.addr %s1232, 128
          %s1234 = scalar_lea.hbm %s6, %s1233
          %s1236 = sshll.u32 %s1225, 4
          %s1237 = int_to_ptr.vmem [resolvable:$true] %s1236
          %1239 = dma.vmem_to_hbm [thread:$0]  %s1237, 256, %s1234, %s1222
        $region56: #{tpu_custom_call.1} parent=43 // pred_fallthru
          _
      $region44: #{tpu_custom_call.1} parent=5 // pred_fallthru
        _
      %p1240 = scmp.le.s32.totalorder 2, %s19
      // Predicated region
      $region57: #{tpu_custom_call.1} parent=5 // pred_check
        %p1241 = pneg %p1240
      $region58: #{tpu_custom_call.1} parent=5 // pred_check_branch
        %1243 = sbr.rel (%p1241) target = $region60
      $region59: #{tpu_custom_call.1} parent=5 // pred_region
        %s1244 = ssub.s32 %s19, 2
        // Predicated region
        $region61: #{tpu_custom_call.1} parent=59 // pred_check
          %p1245 = pneg %p179
        $region62: #{tpu_custom_call.1} parent=59 // pred_check_branch
          %1247 = sbr.rel (%p1245) target = $region64
        $region63: #{tpu_custom_call.1} parent=59 // pred_region
          %s1248 = sand.u32 %s164, 1
          %s1249 = scalar_lea.sflag [#allocation5], %s1248
          %s1250 = sand.u32 %s164, 1
          %s1251 = smul.addr %s1250, 16
          %s1252 = scalar_lea.vmem [#allocation8], %s1251
          %1253 = dma.done %s1249, 256
        $region64: #{tpu_custom_call.1} parent=59 // pred_fallthru
          _
      $region60: #{tpu_custom_call.1} parent=5 // pred_fallthru
        _
    $region6: #{tpu_custom_call.1} parent=1 // loop_footer
      %s23 = sadd.s32 1, %s19
    $region7: #{tpu_custom_call.1} parent=1 // loop_footer_branch
      %18 = sbr.rel target = $region3
    $region8: #{tpu_custom_call.1} parent=1 // loop_exit
      _
    %1254 = vsyncpa [#allocation4], 1
    %s1255 = scalar_lea.sflag [#allocation4], 1
    %1256 = vsyncpa %s1255, 1
    %1257 = vsyncpa [#allocation7], 1
    %1258 = vsyncpa [#allocation5], 1
    %s1259 = scalar_lea.sflag [#allocation5], 1
    %1260 = vsyncpa %s1259, 1

</llo_original>
